<compile_context>
chip_gen: v7x
topology: tpu7x:2x2x1
jax: 0.10.0
libtpu: 0.0.40
codegen_flags: <defaults>
</compile_context>

<pallas_src>
import functools
from collections import namedtuple

import numpy as np
import jax
import jax.numpy as jnp
from jax import lax
from jax.experimental import pallas as pl
from jax.experimental.pallas import tpu as pltpu

UnpoolDescription = namedtuple(
    "UnpoolDescription", ["edge_index", "cluster", "batch", "new_edge_score"]
)


def _round_up(v, m):
    return (v + m - 1) // m * m


# ----------------------------------------------------------------------------
# Kernel 1: raw edge score (Linear on cat[x[src], x[dst]]) + segment softmax
#           over incoming edges of each destination node + add_to_edge_score.
#           Everything edge-indexed is lane-dense ([1, E_pad], edges on lanes).
# ----------------------------------------------------------------------------
def edge_score_kernel(idx_ref, x_ref, w_ref, b_ref, out_ref, *,
                      num_edges, add_to_edge_score):
    x = x_ref[...]                         # [N, C]   f32
    w = w_ref[...]                         # [C, 2]   f32 (col0: src half, col1: dst half)
    idx = idx_ref[...]                     # [2, Ep]  int32 (row0 src, row1 dst, 0-padded)
    bias = b_ref[0]                        # scalar   (SMEM)

    n = x.shape[0]
    ep = idx.shape[1]

    # Linear(cat[x[src], x[dst]]) factored: project once on the MXU ...
    proj = jnp.dot(x, w, preferred_element_type=jnp.float32)          # [N, 2]
    proj_s = proj[:, 0:1]                                             # [N, 1]
    proj_d = proj[:, 1:2]                                             # [N, 1]

    # ... then gather / scatter with masks built in-register from the index
    # vectors (no [E, N] one-hot ever touches HBM, no wasted MXU lanes).
    src_row = idx[0:1, :]                                             # [1, Ep]
    dst_row = idx[1:2, :]                                             # [1, Ep]
    node_ids = lax.broadcasted_iota(jnp.int32, (n, ep), 0)            # [N, Ep]
    src_m = node_ids == src_row                                       # [N, Ep]
    dst_m = node_ids == dst_row                                       # [N, Ep]
    valid = lax.broadcasted_iota(jnp.int32, (1, ep), 1) < num_edges   # [1, Ep]

    contrib = jnp.where(src_m, proj_s, 0.0) + jnp.where(dst_m, proj_d, 0.0)
    raw = jnp.sum(contrib, axis=0, keepdims=True) + bias              # [1, Ep]

    # Segment softmax over destination node (PyG `softmax(raw, edge_index[1])`).
    # Padded edges are excluded from the per-node statistics via `valid`; their
    # own (discarded) lanes may hold garbage.
    neg = jnp.float32(-1e30)
    scat_m = dst_m & valid
    node_max = jnp.max(jnp.where(scat_m, raw, neg), axis=1, keepdims=True)      # [N, 1]
    edge_max = jnp.sum(jnp.where(dst_m, node_max, 0.0), axis=0, keepdims=True)  # [1, Ep]
    ex = jnp.exp(raw - edge_max)                                                # [1, Ep]
    node_sum = jnp.sum(jnp.where(scat_m, ex, 0.0), axis=1, keepdims=True)       # [N, 1]
    edge_sum = jnp.sum(jnp.where(dst_m, node_sum, 0.0), axis=0, keepdims=True)  # [1, Ep]

    score = ex * pl.reciprocal(edge_sum + 1e-16, approx=True)
    out_ref[...] = score + jnp.float32(add_to_edge_score)


def compute_edge_scores(x, edge_index, weight, bias, add_to_edge_score):
    """Pallas wrapper for kernel 1: returns normalized edge scores, shape [E]."""
    N, C = x.shape
    E = edge_index.shape[1]
    E_pad = _round_up(E, 128)   # lane-dense output row

    idx = jnp.zeros((2, E_pad), jnp.int32).at[:, :E].set(edge_index.astype(jnp.int32))
    w2 = jnp.stack([weight[0, :C], weight[0, C:]], axis=1)             # [C, 2]

    cost = pl.CostEstimate(
        flops=2 * N * C * 2 + 10 * N * E_pad,
        transcendentals=2 * E_pad,
        bytes_accessed=(N * C + C * 2 + 2 * E_pad + E_pad) * 4,
    )
    score_row = pl.pallas_call(
        functools.partial(edge_score_kernel, num_edges=E,
                          add_to_edge_score=add_to_edge_score),
        out_shape=jax.ShapeDtypeStruct((1, E_pad), jnp.float32),
        in_specs=[
            pl.BlockSpec(memory_space=pltpu.MemorySpace.VMEM),   # idx [2, E_pad]
            pl.BlockSpec(memory_space=pltpu.MemorySpace.VMEM),   # x   [N, C]
            pl.BlockSpec(memory_space=pltpu.MemorySpace.VMEM),   # w2  [C, 2]
            pl.BlockSpec(memory_space=pltpu.MemorySpace.SMEM),   # bias (1,)
        ],
        out_specs=pl.BlockSpec(memory_space=pltpu.MemorySpace.VMEM),
        compiler_params=pltpu.CompilerParams(vmem_limit_bytes=32 * 1024 * 1024),
        cost_estimate=cost,
    )(idx, x.astype(jnp.float32), w2, bias)
    # TODO(synk): for very large graphs, tile the edge axis with per-node running
    # max/sum carry (online-softmax style) so the [N, E] in-register masks stay
    # bounded; single-pass is fine at these sizes.
    return score_row[0, :E]


# ----------------------------------------------------------------------------
# Kernel 2: new_x[k] = (sum_{n: cluster[n]==k} x[n]) * new_edge_score[k]
#           Gridded over 128-row output-cluster tiles ("parallel"); the [KT, N]
#           assignment one-hot is built in-register from the cluster index row
#           and fed to the MXU in bf16 with f32 accumulation.
# ----------------------------------------------------------------------------
def pool_kernel(cluster_ref, x_ref, score_ref, out_ref, *, k_tile):
    k0 = pl.program_id(0) * k_tile
    cluster = cluster_ref[...]                                        # [1, N] int32
    n = cluster.shape[1]
    rows = lax.broadcasted_iota(jnp.int32, (k_tile, n), 0) + k0       # [KT, N]
    assign = jnp.where(rows == cluster, 1.0, 0.0).astype(x_ref.dtype)  # [KT, N] bf16
    pooled = jnp.dot(assign, x_ref[...],
                     preferred_element_type=jnp.float32)              # [KT, C] f32
    out_ref[...] = (pooled * score_ref[...]).astype(out_ref.dtype)


# ----------------------------------------------------------------------------
# Wrapper: full EdgePooling.forward semantics
# ----------------------------------------------------------------------------
def edge_pooling_forward(x, edge_index, batch, weight, bias, add_to_edge_score=0.5):
    # dropout p=0 / eval mode -> identity (matches default config)
    N, C = x.shape
    E = edge_index.shape[1]

    # --- Pallas kernel 1: normalized edge scores ------------------------------
    edge_score = compute_edge_scores(x, edge_index, weight, bias, add_to_edge_score)

    # --- host: greedy edge contraction (sequential, data dependent) -----------
    # TODO(synk): __merge_edges__ matching loop has no Pallas equivalent; it is
    # the same CPU python loop (numpy argsort + set) the PyTorch reference uses.
    es_np = np.asarray(jax.device_get(edge_score), dtype=np.float32)
    ei_np = np.asarray(jax.device_get(edge_index))
    batch_np = np.asarray(jax.device_get(batch))

    nodes_remaining = set(range(N))
    cluster = np.empty(N, dtype=np.int64)
    order = np.argsort(es_np, kind="stable")[::-1]

    i = 0
    new_edge_indices = []
    for e_idx in order.tolist():
        s = int(ei_np[0, e_idx])
        if s not in nodes_remaining:
            continue
        t = int(ei_np[1, e_idx])
        if t not in nodes_remaining:
            continue
        new_edge_indices.append(e_idx)
        cluster[s] = i
        nodes_remaining.remove(s)
        if s != t:
            cluster[t] = i
            nodes_remaining.remove(t)
        i += 1
    for node_idx in sorted(nodes_remaining):
        cluster[node_idx] = i
        i += 1
    K = i

    new_edge_score_np = (es_np[new_edge_indices] if new_edge_indices
                         else np.zeros((0,), np.float32))
    if len(nodes_remaining) > 0:
        new_edge_score_np = np.concatenate(
            [new_edge_score_np,
             np.ones(K - len(new_edge_indices), dtype=np.float32)])

    # --- Pallas kernel 2: pooled features, gridded over K tiles ---------------
    KT = 128
    K_pad = max(KT, _round_up(K, KT))
    cluster_row = jnp.asarray(cluster, jnp.int32).reshape(1, N)
    score_pad = np.ones((K_pad, 1), np.float32)
    score_pad[:K, 0] = new_edge_score_np
    score_col = jnp.asarray(score_pad)
    x_bf16 = x.astype(jnp.bfloat16)          # one-hot is exact; accumulation is f32

    pool_cost = pl.CostEstimate(
        flops=2 * K_pad * N * C,
        transcendentals=0,
        bytes_accessed=N * C * 2 + (K_pad * C + K_pad + N) * 4,
    )
    new_x_pad = pl.pallas_call(
        functools.partial(pool_kernel, k_tile=KT),
        grid=(K_pad // KT,),
        out_shape=jax.ShapeDtypeStruct((K_pad, C), jnp.float32),
        in_specs=[
            pl.BlockSpec((1, N), lambda k: (0, 0)),      # cluster row (resident)
            pl.BlockSpec((N, C), lambda k: (0, 0)),      # x (resident, bf16)
            pl.BlockSpec((KT, 1), lambda k: (k, 0)),     # per-tile new_edge_score
        ],
        out_specs=pl.BlockSpec((KT, C), lambda k: (k, 0)),
        compiler_params=pltpu.CompilerParams(
            dimension_semantics=("parallel",),
            vmem_limit_bytes=32 * 1024 * 1024),
        cost_estimate=pool_cost,
    )(cluster_row, x_bf16, score_col)
    new_x = new_x_pad[:K]

    # --- host: coalesce(cluster[edge_index]) and new batch vector -------------
    ce = cluster[ei_np]                    # [2, E] coarse endpoints
    lin_idx = ce[0] * K + ce[1]
    uniq = np.unique(lin_idx)              # sorted + dedup == coalesce
    new_edge_index = np.stack([uniq // K, uniq % K]).astype(np.int64)

    new_batch = np.empty(K, dtype=batch_np.dtype)
    new_batch[cluster] = batch_np

    unpool_info = UnpoolDescription(
        edge_index=edge_index,
        cluster=jnp.asarray(cluster, jnp.int32),
        batch=batch,
        new_edge_score=jnp.asarray(new_edge_score_np, jnp.float32),
    )

    # int32 stands in for torch's int64 (.long()) since JAX x64 is off by default
    return (new_x,
            jnp.asarray(new_edge_index, jnp.int32),
            jnp.asarray(new_batch, jnp.int32),
            unpool_info)


if __name__ == "__main__":
    key = jax.random.PRNGKey(0)
    N, C, E = 256, 128, 512   # nodes, in_channels, edges (lane-dense C and E)

    k1, k2, k3, k4, k5 = jax.random.split(key, 5)
    x = jax.random.normal(k1, (N, C), jnp.float32)
    src = jax.random.randint(k2, (E,), 0, N, jnp.int32)
    dst = jax.random.randint(k3, (E,), 0, N, jnp.int32)
    edge_index = jnp.stack([src, dst])                 # [2, E]
    batch = jnp.zeros((N,), jnp.int32)                 # single graph

    # deterministic Linear(2*C -> 1) parameters
    weight = jax.random.normal(k4, (1, 2 * C), jnp.float32) * 0.1
    bias = (jax.random.normal(k5, (1,), jnp.float32) * 0.1).astype(jnp.float32)

    new_x, new_edge_index, new_batch, unpool_info = edge_pooling_forward(
        x, edge_index, batch, weight, bias, add_to_edge_score=0.5)
    jax.block_until_ready(new_x)
    jax.block_until_ready(unpool_info.new_edge_score)

    # ---- shape checks --------------------------------------------------------
    assert new_x.ndim == 2 and new_x.shape[1] == C
    assert new_edge_index.shape[0] == 2
    assert new_batch.shape[0] == new_x.shape[0]
    assert unpool_info.new_edge_score.shape[0] == new_x.shape[0]

    # ---- numeric check, kernel 1 (segment softmax edge scores) --------------
    xs = np.asarray(jax.device_get(x), np.float64)
    w_np = np.asarray(jax.device_get(weight), np.float64)[0]
    b_np = float(np.asarray(jax.device_get(bias))[0])
    src_np = np.asarray(jax.device_get(edge_index))[0]
    dst_np = np.asarray(jax.device_get(edge_index))[1]
    raw_ref = xs[src_np] @ w_np[:C] + xs[dst_np] @ w_np[C:] + b_np
    nmax = np.full(N, -np.inf)
    np.maximum.at(nmax, dst_np, raw_ref)
    exr = np.exp(raw_ref - nmax[dst_np])
    nsum = np.zeros(N)
    np.add.at(nsum, dst_np, exr)
    score_ref = exr / (nsum[dst_np] + 1e-16) + 0.5
    scores_kernel = np.asarray(jax.device_get(
        compute_edge_scores(x, edge_index, weight, bias, 0.5)), np.float64)
    np.testing.assert_allclose(scores_kernel, score_ref, rtol=5e-2, atol=5e-2)

    # ---- numeric check, kernel 2 (scatter-add pooling + score scaling) ------
    cluster_np = np.asarray(jax.device_get(unpool_info.cluster))
    nes_np = np.asarray(jax.device_get(unpool_info.new_edge_score), np.float64)
    K = new_x.shape[0]
    pooled_ref = np.zeros((K, C), np.float64)
    np.add.at(pooled_ref, cluster_np, xs)
    pooled_ref *= nes_np[:, None]
    np.testing.assert_allclose(np.asarray(jax.device_get(new_x), np.float64),
                               pooled_ref, rtol=5e-2, atol=5e-2)

    print("KERNEL_OK")
</pallas_src>

<mosaic_0001>
module attributes {stable_mosaic.version = 11 : i64} {
  func.func @edge_score_kernel(%arg0: memref<2x512xi32, #tpu.memory_space<vmem>>, %arg1: memref<256x128xf32, #tpu.memory_space<vmem>>, %arg2: memref<128x2xf32, #tpu.memory_space<vmem>>, %arg3: memref<1xf32, #tpu.memory_space<smem>>, %arg4: memref<1x512xf32, #tpu.memory_space<vmem>>) attributes {dimension_semantics = [], scalar_prefetch = 0 : i64, scratch_operands = 0 : i64, tpu.core_type = #tpu.core_type<tc>} {
    %c0 = arith.constant 0 : index
    %c0_0 = arith.constant 0 : index
    %0 = vector.load %arg1[%c0, %c0_0] : memref<256x128xf32, #tpu.memory_space<vmem>>, vector<256x128xf32>
    %c0_1 = arith.constant 0 : index
    %c0_2 = arith.constant 0 : index
    %1 = vector.load %arg2[%c0_1, %c0_2] : memref<128x2xf32, #tpu.memory_space<vmem>>, vector<128x2xf32>
    %c0_3 = arith.constant 0 : index
    %c0_4 = arith.constant 0 : index
    %2 = vector.load %arg0[%c0_3, %c0_4] : memref<2x512xi32, #tpu.memory_space<vmem>>, vector<2x512xi32>
    %c0_5 = arith.constant 0 : index
    %3 = memref.load %arg3[%c0_5] : memref<1xf32, #tpu.memory_space<smem>>
    %cst = arith.constant dense<0.000000e+00> : vector<256x2xf32>
    %4 = tpu.matmul %0, %1, %cst {dimension_numbers = #tpu.dot_dimension_numbers<[1], [0], [0], [1], [0, 0, 1, 1], [], []>} : vector<256x128xf32>, vector<128x2xf32>, vector<256x2xf32> -> vector<256x2xf32>
    %5 = vector.extract_strided_slice %4 {offsets = [0, 0], sizes = [256, 1], strides = [1, 1]} : vector<256x2xf32> to vector<256x1xf32>
    %6 = vector.extract_strided_slice %4 {offsets = [0, 1], sizes = [256, 1], strides = [1, 1]} : vector<256x2xf32> to vector<256x1xf32>
    %7 = vector.extract_strided_slice %2 {offsets = [0, 0], sizes = [1, 512], strides = [1, 1]} : vector<2x512xi32> to vector<1x512xi32>
    %8 = vector.extract_strided_slice %2 {offsets = [1, 0], sizes = [1, 512], strides = [1, 1]} : vector<2x512xi32> to vector<1x512xi32>
    %9 = tpu.iota {dimensions = array<i32: 0>} : vector<256x512xi32>
    %10 = vector.broadcast %7 : vector<1x512xi32> to vector<256x512xi32>
    %11 = arith.cmpi eq, %9, %10 : vector<256x512xi32>
    %12 = vector.broadcast %8 : vector<1x512xi32> to vector<256x512xi32>
    %13 = arith.cmpi eq, %9, %12 : vector<256x512xi32>
    %14 = tpu.iota {dimensions = array<i32: 1>} : vector<1x512xi32>
    %c512_i32 = arith.constant 512 : i32
    %15 = vector.broadcast %c512_i32 : i32 to vector<1x512xi32>
    %16 = arith.cmpi slt, %14, %15 : vector<1x512xi32>
    %cst_6 = arith.constant 0.000000e+00 : f32
    %17 = vector.shape_cast %5 : vector<256x1xf32> to vector<256x1xf32>
    %18 = vector.broadcast %17 : vector<256x1xf32> to vector<256x512xf32>
    %19 = vector.broadcast %cst_6 : f32 to vector<256x512xf32>
    %20 = arith.select %11, %18, %19 : vector<256x512xi1>, vector<256x512xf32>
    %cst_7 = arith.constant 0.000000e+00 : f32
    %21 = vector.shape_cast %6 : vector<256x1xf32> to vector<256x1xf32>
    %22 = vector.broadcast %21 : vector<256x1xf32> to vector<256x512xf32>
    %23 = vector.broadcast %cst_7 : f32 to vector<256x512xf32>
    %24 = arith.select %13, %22, %23 : vector<256x512xi1>, vector<256x512xf32>
    %25 = arith.addf %20, %24 : vector<256x512xf32>
    %cst_8 = arith.constant dense<0.000000e+00> : vector<512xf32>
    %26 = vector.multi_reduction <add>, %25, %cst_8 [0] : vector<256x512xf32> to vector<512xf32>
    %27 = vector.shape_cast %26 : vector<512xf32> to vector<1x512xf32>
    %28 = vector.broadcast %3 : f32 to vector<1x512xf32>
    %29 = arith.addf %27, %28 : vector<1x512xf32>
    %30 = vector.broadcast %16 : vector<1x512xi1> to vector<256x512xi1>
    %31 = arith.andi %13, %30 : vector<256x512xi1>
    %cst_9 = arith.constant -1.000000e+30 : f32
    %32 = vector.shape_cast %29 : vector<1x512xf32> to vector<1x512xf32>
    %33 = vector.broadcast %32 : vector<1x512xf32> to vector<256x512xf32>
    %34 = vector.broadcast %cst_9 : f32 to vector<256x512xf32>
    %35 = arith.select %31, %33, %34 : vector<256x512xi1>, vector<256x512xf32>
    %cst_10 = arith.constant dense<0xFF800000> : vector<256xf32>
    %36 = vector.multi_reduction <maximumf>, %35, %cst_10 [1] : vector<256x512xf32> to vector<256xf32>
    %37 = vector.shape_cast %36 : vector<256xf32> to vector<256x1xf32>
    %cst_11 = arith.constant 0.000000e+00 : f32
    %38 = vector.shape_cast %37 : vector<256x1xf32> to vector<256x1xf32>
    %39 = vector.broadcast %38 : vector<256x1xf32> to vector<256x512xf32>
    %40 = vector.broadcast %cst_11 : f32 to vector<256x512xf32>
    %41 = arith.select %13, %39, %40 : vector<256x512xi1>, vector<256x512xf32>
    %cst_12 = arith.constant dense<0.000000e+00> : vector<512xf32>
    %42 = vector.multi_reduction <add>, %41, %cst_12 [0] : vector<256x512xf32> to vector<512xf32>
    %43 = vector.shape_cast %42 : vector<512xf32> to vector<1x512xf32>
    %44 = arith.subf %29, %43 : vector<1x512xf32>
    %45 = math.exp %44 : vector<1x512xf32>
    %cst_13 = arith.constant 0.000000e+00 : f32
    %46 = vector.shape_cast %45 : vector<1x512xf32> to vector<1x512xf32>
    %47 = vector.broadcast %46 : vector<1x512xf32> to vector<256x512xf32>
    %48 = vector.broadcast %cst_13 : f32 to vector<256x512xf32>
    %49 = arith.select %31, %47, %48 : vector<256x512xi1>, vector<256x512xf32>
    %cst_14 = arith.constant dense<0.000000e+00> : vector<256xf32>
    %50 = vector.multi_reduction <add>, %49, %cst_14 [1] : vector<256x512xf32> to vector<256xf32>
    %51 = vector.shape_cast %50 : vector<256xf32> to vector<256x1xf32>
    %cst_15 = arith.constant 0.000000e+00 : f32
    %52 = vector.shape_cast %51 : vector<256x1xf32> to vector<256x1xf32>
    %53 = vector.broadcast %52 : vector<256x1xf32> to vector<256x512xf32>
    %54 = vector.broadcast %cst_15 : f32 to vector<256x512xf32>
    %55 = arith.select %13, %53, %54 : vector<256x512xi1>, vector<256x512xf32>
    %cst_16 = arith.constant dense<0.000000e+00> : vector<512xf32>
    %56 = vector.multi_reduction <add>, %55, %cst_16 [0] : vector<256x512xf32> to vector<512xf32>
    %57 = vector.shape_cast %56 : vector<512xf32> to vector<1x512xf32>
    %cst_17 = arith.constant 1.000000e-16 : f32
    %58 = vector.broadcast %cst_17 : f32 to vector<1x512xf32>
    %59 = arith.addf %57, %58 : vector<1x512xf32>
    %60 = tpu.reciprocal %59 {approx = true} : vector<1x512xf32> -> vector<1x512xf32>
    %61 = arith.mulf %45, %60 : vector<1x512xf32>
    %cst_18 = arith.constant 5.000000e-01 : f32
    %62 = vector.broadcast %cst_18 : f32 to vector<1x512xf32>
    %63 = arith.addf %61, %62 : vector<1x512xf32>
    %c0_19 = arith.constant 0 : index
    %c0_20 = arith.constant 0 : index
    %64 = vector.load %arg4[%c0_19, %c0_20] : memref<1x512xf32, #tpu.memory_space<vmem>>, vector<1x512xf32>
    tpu.vector_store %arg4[%c0_19, %c0_20], %63 {strides = array<i32>} : memref<1x512xf32, #tpu.memory_space<vmem>>, vector<1x512xf32>,
    return
  }
}

</mosaic_0001>

<llo_original>
// kernel: tpu_custom_call.1
$region0: #{tpu_custom_call.1}
  #allocation0 [shape = 'u32[]', space=smem, size = 0x4, offset = 0x4, fixed_abs, tag = 'smem constant byte address 0x4 - core index']
  #allocation1 [shape = 'u32[144,128]{1,0:T(1,128)}', space=vmem, size = 0x12000, scoped, tag = 'internal scratch']
  #allocation2 [shape = 'f32[1]{0:T(128)S(6)}', space=smem, size = 0x200, scoped, tag = 'scoped memory for tpu_custom_call.1']
  %s0 = inlined_call_operand.vmem [shape: s32[2,512], index: 0, kind: input, shape index: {}]
  %s1 = inlined_call_operand.hbm [shape: f32[256,128], index: 1, kind: input, shape index: {}]
  %s2 = inlined_call_operand.vmem [shape: f32[128,2], index: 2, kind: input, shape index: {}]
  %s3 = inlined_call_operand.<no memory space> [shape: f32[1], index: 3, kind: input, shape index: {}]
  %s4 = inlined_call_operand.hbm [shape: f32[1,512], index: 4, kind: output, shape index: {}]
  %s5 = sld [smem:[#allocation0]]
  $region30: #{tpu_custom_call.1} parent=0
    _
  %s7 = ssub.s32 1, %s5
  %s8 = scalar_select 0, %s7, %s5
  %9 = sst [smem:[#allocation2]] %s3
  $region1: #{tpu_custom_call.1} parent=0
    #allocation3 [shape = 'u8[131072]{0}', space=vmem, size = 0x20000, scoped, tag = 'input window, operand 1, single buffered']
    #allocation4 [shape = 's32[1]{0}', space=sflag, size = 0x4, scoped, tag = 'scoped memory for tpu_custom_call.1']
    #allocation5 [shape = 's32[1]{0}', space=sflag, size = 0x4, scoped, tag = 'scoped memory for tpu_custom_call.1']
    #allocation6 [shape = 'u8[2048]{0}', space=vmem, size = 0x800, scoped, tag = 'output window, operand 0, single buffered']
    %10 = vsyncpa [#allocation4], 0
    %11 = vsyncpa [#allocation5], 0
    // Predicated region
    $region2: #{tpu_custom_call.1} parent=1 // pred_check
      _
    $region3: #{tpu_custom_call.1} parent=1 // pred_check_branch
      %13 = sbr.rel (0) target = $region5
    $region4: #{tpu_custom_call.1} parent=1 // pred_region
      _
    $region5: #{tpu_custom_call.1} parent=1 // pred_fallthru
      _
    // Predicated region
    $region6: #{tpu_custom_call.1} parent=1 // pred_check
      _
    $region7: #{tpu_custom_call.1} parent=1 // pred_check_branch
      %15 = sbr.rel (0) target = $region9
    $region8: #{tpu_custom_call.1} parent=1 // pred_region
      %s17 = ssub.s32 4096, 4096
      %18 = vsyncadd [#allocation4], %s17
      %s19 = sshll.u32 [#allocation3], 4
      %s20 = int_to_ptr.vmem [resolvable:$true] %s19
      %25 = dma.hbm_to_vmem [thread:$0]  %s1, 4096, %s20, [#allocation4], 128, 128, 8
    $region9: #{tpu_custom_call.1} parent=1 // pred_fallthru
      _
    // Predicated region
    $region10: #{tpu_custom_call.1} parent=1 // pred_check
      _
    $region11: #{tpu_custom_call.1} parent=1 // pred_check_branch
      %27 = sbr.rel (0) target = $region13
    $region12: #{tpu_custom_call.1} parent=1 // pred_region
      _
    $region13: #{tpu_custom_call.1} parent=1 // pred_fallthru
      _
    // Predicated region
    $region14: #{tpu_custom_call.1} parent=1 // pred_check
      _
    $region15: #{tpu_custom_call.1} parent=1 // pred_check_branch
      %29 = sbr.rel (0) target = $region17
    $region16: #{tpu_custom_call.1} parent=1 // pred_region
      _
    $region17: #{tpu_custom_call.1} parent=1 // pred_fallthru
      _
    // Predicated region
    $region18: #{tpu_custom_call.1} parent=1 // pred_check
      _
    $region19: #{tpu_custom_call.1} parent=1 // pred_check_branch
      %31 = sbr.rel (0) target = $region21
    $region20: #{tpu_custom_call.1} parent=1 // pred_region
      %32 = dma.done [#allocation4], 4096
    $region21: #{tpu_custom_call.1} parent=1 // pred_fallthru
      _
    %v33 = vld [vmem:[#allocation3] sm:$0xff]
    %v34 = vld [vmem:[#allocation3 + $0x8] sm:$0xff]
    %v35 = vld [vmem:[#allocation3 + $0x10] sm:$0xff]
    %v36 = vld [vmem:[#allocation3 + $0x18] sm:$0xff]
    %v37 = vld [vmem:[#allocation3 + $0x20] sm:$0xff]
    %v38 = vld [vmem:[#allocation3 + $0x28] sm:$0xff]
    %v39 = vld [vmem:[#allocation3 + $0x30] sm:$0xff]
    %v40 = vld [vmem:[#allocation3 + $0x38] sm:$0xff]
    %v41 = vld [vmem:[#allocation3 + $0x40] sm:$0xff]
    %v42 = vld [vmem:[#allocation3 + $0x48] sm:$0xff]
    %v43 = vld [vmem:[#allocation3 + $0x50] sm:$0xff]
    %v44 = vld [vmem:[#allocation3 + $0x58] sm:$0xff]
    %v45 = vld [vmem:[#allocation3 + $0x60] sm:$0xff]
    %v46 = vld [vmem:[#allocation3 + $0x68] sm:$0xff]
    %v47 = vld [vmem:[#allocation3 + $0x70] sm:$0xff]
    %v48 = vld [vmem:[#allocation3 + $0x78] sm:$0xff]
    %v49 = vld [vmem:[#allocation3 + $0x80] sm:$0xff]
    %v50 = vld [vmem:[#allocation3 + $0x88] sm:$0xff]
    %v51 = vld [vmem:[#allocation3 + $0x90] sm:$0xff]
    %v52 = vld [vmem:[#allocation3 + $0x98] sm:$0xff]
    %v53 = vld [vmem:[#allocation3 + $0xa0] sm:$0xff]
    %v54 = vld [vmem:[#allocation3 + $0xa8] sm:$0xff]
    %v55 = vld [vmem:[#allocation3 + $0xb0] sm:$0xff]
    %v56 = vld [vmem:[#allocation3 + $0xb8] sm:$0xff]
    %v57 = vld [vmem:[#allocation3 + $0xc0] sm:$0xff]
    %v58 = vld [vmem:[#allocation3 + $0xc8] sm:$0xff]
    %v59 = vld [vmem:[#allocation3 + $0xd0] sm:$0xff]
    %v60 = vld [vmem:[#allocation3 + $0xd8] sm:$0xff]
    %v61 = vld [vmem:[#allocation3 + $0xe0] sm:$0xff]
    %v62 = vld [vmem:[#allocation3 + $0xe8] sm:$0xff]
    %v63 = vld [vmem:[#allocation3 + $0xf0] sm:$0xff]
    %v64 = vld [vmem:[#allocation3 + $0xf8] sm:$0xff]
    %v65 = vld [vmem:[%s2] sm:$0xff]
    %v66 = vld [vmem:[%s2 + $0x8] sm:$0xff]
    %v67 = vld [vmem:[%s2 + $0x10] sm:$0xff]
    %v68 = vld [vmem:[%s2 + $0x18] sm:$0xff]
    %v69 = vld [vmem:[%s2 + $0x20] sm:$0xff]
    %v70 = vld [vmem:[%s2 + $0x28] sm:$0xff]
    %v71 = vld [vmem:[%s2 + $0x30] sm:$0xff]
    %v72 = vld [vmem:[%s2 + $0x38] sm:$0xff]
    %v73 = vld [vmem:[%s2 + $0x40] sm:$0xff]
    %v74 = vld [vmem:[%s2 + $0x48] sm:$0xff]
    %v75 = vld [vmem:[%s2 + $0x50] sm:$0xff]
    %v76 = vld [vmem:[%s2 + $0x58] sm:$0xff]
    %v77 = vld [vmem:[%s2 + $0x60] sm:$0xff]
    %v78 = vld [vmem:[%s2 + $0x68] sm:$0xff]
    %v79 = vld [vmem:[%s2 + $0x70] sm:$0xff]
    %v80 = vld [vmem:[%s2 + $0x78] sm:$0xff]
    %v81 = vld [vmem:[%s0] sm:$0xff]
    %s82 = sld [smem:[#allocation2]]
    %83 = vmatprep.subr.mxu0 0.0
    %84 = vmatpush1.msra.mxu0 %v65
    %85 = vmatprep.subr.mxu0 0.0
    %86 = vmatpush1.msra.mxu0 %v66
    %87 = vmatprep.subr.mxu0 0.0
    %88 = vmatpush1.msra.mxu0 %v67
    %89 = vmatprep.subr.mxu0 0.0
    %90 = vmatpush1.msra.mxu0 %v68
    %91 = vmatprep.subr.mxu0 0.0
    %92 = vmatpush1.msra.mxu0 %v69
    %93 = vmatprep.subr.mxu0 0.0
    %94 = vmatpush1.msra.mxu0 %v70
    %95 = vmatprep.subr.mxu0 0.0
    %96 = vmatpush1.msra.mxu0 %v71
    %97 = vmatprep.subr.mxu0 0.0
    %98 = vmatpush1.msra.mxu0 %v72
    %99 = vmatprep.subr.mxu0 0.0
    %100 = vmatpush1.msra.mxu0 %v73
    %101 = vmatprep.subr.mxu0 0.0
    %102 = vmatpush1.msra.mxu0 %v74
    %103 = vmatprep.subr.mxu0 0.0
    %104 = vmatpush1.msra.mxu0 %v75
    %105 = vmatprep.subr.mxu0 0.0
    %106 = vmatpush1.msra.mxu0 %v76
    %107 = vmatprep.subr.mxu0 0.0
    %108 = vmatpush1.msra.mxu0 %v77
    %109 = vmatprep.subr.mxu0 0.0
    %110 = vmatpush1.msra.mxu0 %v78
    %111 = vmatprep.subr.mxu0 0.0
    %112 = vmatpush1.msra.mxu0 %v79
    %113 = vmatprep.subr.mxu0 0.0
    %114 = vmatpush1.msra.mxu0 %v80
    %115 = vmatprep.subr.mxu0 0.0
    %116 = vmatpush1.msra.mxu0 0.0
    %117 = vmatprep.subr.mxu0 0.0
    %118 = vmatpush1.msra.mxu0 0.0
    %119 = vmatprep.subr.mxu0 0.0
    %120 = vmatpush1.msra.mxu0 0.0
    %121 = vmatprep.subr.mxu0 0.0
    %122 = vmatpush1.msra.mxu0 0.0
    %123 = vmatprep.subr.mxu0 0.0
    %124 = vmatpush1.msra.mxu0 0.0
    %125 = vmatprep.subr.mxu0 0.0
    %126 = vmatpush1.msra.mxu0 0.0
    %127 = vmatprep.subr.mxu0 0.0
    %128 = vmatpush1.msra.mxu0 0.0
    %129 = vmatprep.subr.mxu0 0.0
    %130 = vmatpush1.msra.mxu0 0.0
    %131 = vmatprep.subr.mxu0 0.0
    %132 = vmatpush1.msra.mxu0 0.0
    %133 = vmatprep.subr.mxu0 0.0
    %134 = vmatpush1.msra.mxu0 0.0
    %135 = vmatprep.subr.mxu0 0.0
    %136 = vmatpush1.msra.mxu0 0.0
    %137 = vmatprep.subr.mxu0 0.0
    %138 = vmatpush1.msra.mxu0 0.0
    %139 = vmatprep.subr.mxu0 0.0
    %140 = vmatpush1.msra.mxu0 0.0
    %141 = vmatprep.subr.mxu0 0.0
    %142 = vmatpush1.msra.mxu0 0.0
    %143 = vmatprep.subr.mxu0 0.0
    %144 = vmatpush1.msra.mxu0 0.0
    %145 = vmatprep.subr.mxu0 0.0
    %146 = vmatpush1.msra.mxu0 0.0
    %147 = vmatprep.mubr.f32.mxu0 0.0
    %148 = vmatmul.mubr.f32.gmra.mrb[0].mxu0 %v33
    %v149 = vpop.f32.mrb[0].mxu0
    %v150 = vadd.f32 0.0, %v149
    %v151 = vpop.f32.mrb[0].mxu0
    %152 = vmatprep.mubr.f32.mxu0 0.0
    %153 = vmatmul.mubr.f32.gmra.mrb[0].mxu0 %v34
    %v154 = vpop.f32.mrb[0].mxu0
    %v155 = vadd.f32 0.0, %v154
    %v156 = vpop.f32.mrb[0].mxu0
    %157 = vmatprep.mubr.f32.mxu0 0.0
    %158 = vmatmul.mubr.f32.gmra.mrb[0].mxu0 %v35
    %v159 = vpop.f32.mrb[0].mxu0
    %v160 = vadd.f32 0.0, %v159
    %v161 = vpop.f32.mrb[0].mxu0
    %162 = vmatprep.mubr.f32.mxu0 0.0
    %163 = vmatmul.mubr.f32.gmra.mrb[0].mxu0 %v36
    %v164 = vpop.f32.mrb[0].mxu0
    %v165 = vadd.f32 0.0, %v164
    %v166 = vpop.f32.mrb[0].mxu0
    %167 = vmatprep.mubr.f32.mxu0 0.0
    %168 = vmatmul.mubr.f32.gmra.mrb[0].mxu0 %v37
    %v169 = vpop.f32.mrb[0].mxu0
    %v170 = vadd.f32 0.0, %v169
    %v171 = vpop.f32.mrb[0].mxu0
    %172 = vmatprep.mubr.f32.mxu0 0.0
    %173 = vmatmul.mubr.f32.gmra.mrb[0].mxu0 %v38
    %v174 = vpop.f32.mrb[0].mxu0
    %v175 = vadd.f32 0.0, %v174
    %v176 = vpop.f32.mrb[0].mxu0
    %177 = vmatprep.mubr.f32.mxu0 0.0
    %178 = vmatmul.mubr.f32.gmra.mrb[0].mxu0 %v39
    %v179 = vpop.f32.mrb[0].mxu0
    %v180 = vadd.f32 0.0, %v179
    %v181 = vpop.f32.mrb[0].mxu0
    %182 = vmatprep.mubr.f32.mxu0 0.0
    %183 = vmatmul.mubr.f32.gmra.mrb[0].mxu0 %v40
    %v184 = vpop.f32.mrb[0].mxu0
    %v185 = vadd.f32 0.0, %v184
    %v186 = vpop.f32.mrb[0].mxu0
    %187 = vmatprep.mubr.f32.mxu0 0.0
    %188 = vmatmul.mubr.f32.gmra.mrb[0].mxu0 %v41
    %v189 = vpop.f32.mrb[0].mxu0
    %v190 = vadd.f32 0.0, %v189
    %v191 = vpop.f32.mrb[0].mxu0
    %192 = vmatprep.mubr.f32.mxu0 0.0
    %193 = vmatmul.mubr.f32.gmra.mrb[0].mxu0 %v42
    %v194 = vpop.f32.mrb[0].mxu0
    %v195 = vadd.f32 0.0, %v194
    %v196 = vpop.f32.mrb[0].mxu0
    %197 = vmatprep.mubr.f32.mxu0 0.0
    %198 = vmatmul.mubr.f32.gmra.mrb[0].mxu0 %v43
    %v199 = vpop.f32.mrb[0].mxu0
    %v200 = vadd.f32 0.0, %v199
    %v201 = vpop.f32.mrb[0].mxu0
    %202 = vmatprep.mubr.f32.mxu0 0.0
    %203 = vmatmul.mubr.f32.gmra.mrb[0].mxu0 %v44
    %v204 = vpop.f32.mrb[0].mxu0
    %v205 = vadd.f32 0.0, %v204
    %v206 = vpop.f32.mrb[0].mxu0
    %207 = vmatprep.mubr.f32.mxu0 0.0
    %208 = vmatmul.mubr.f32.gmra.mrb[0].mxu0 %v45
    %v209 = vpop.f32.mrb[0].mxu0
    %v210 = vadd.f32 0.0, %v209
    %v211 = vpop.f32.mrb[0].mxu0
    %212 = vmatprep.mubr.f32.mxu0 0.0
    %213 = vmatmul.mubr.f32.gmra.mrb[0].mxu0 %v46
    %v214 = vpop.f32.mrb[0].mxu0
    %v215 = vadd.f32 0.0, %v214
    %v216 = vpop.f32.mrb[0].mxu0
    %217 = vmatprep.mubr.f32.mxu0 0.0
    %218 = vmatmul.mubr.f32.gmra.mrb[0].mxu0 %v47
    %v219 = vpop.f32.mrb[0].mxu0
    %v220 = vadd.f32 0.0, %v219
    %v221 = vpop.f32.mrb[0].mxu0
    %222 = vmatprep.mubr.f32.mxu0 0.0
    %223 = vmatmul.mubr.f32.gmra.mrb[0].mxu0 %v48
    %v224 = vpop.f32.mrb[0].mxu0
    %v225 = vadd.f32 0.0, %v224
    %v226 = vpop.f32.mrb[0].mxu0
    %227 = vmatprep.mubr.f32.mxu0 0.0
    %228 = vmatmul.mubr.f32.gmra.mrb[0].mxu0 %v49
    %v229 = vpop.f32.mrb[0].mxu0
    %v230 = vadd.f32 0.0, %v229
    %v231 = vpop.f32.mrb[0].mxu0
    %232 = vmatprep.mubr.f32.mxu0 0.0
    %233 = vmatmul.mubr.f32.gmra.mrb[0].mxu0 %v50
    %v234 = vpop.f32.mrb[0].mxu0
    %v235 = vadd.f32 0.0, %v234
    %v236 = vpop.f32.mrb[0].mxu0
    %237 = vmatprep.mubr.f32.mxu0 0.0
    %238 = vmatmul.mubr.f32.gmra.mrb[0].mxu0 %v51
    %v239 = vpop.f32.mrb[0].mxu0
    %v240 = vadd.f32 0.0, %v239
    %v241 = vpop.f32.mrb[0].mxu0
    %242 = vmatprep.mubr.f32.mxu0 0.0
    %243 = vmatmul.mubr.f32.gmra.mrb[0].mxu0 %v52
    %v244 = vpop.f32.mrb[0].mxu0
    %v245 = vadd.f32 0.0, %v244
    %v246 = vpop.f32.mrb[0].mxu0
    %247 = vmatprep.mubr.f32.mxu0 0.0
    %248 = vmatmul.mubr.f32.gmra.mrb[0].mxu0 %v53
    %v249 = vpop.f32.mrb[0].mxu0
    %v250 = vadd.f32 0.0, %v249
    %v251 = vpop.f32.mrb[0].mxu0
    %252 = vmatprep.mubr.f32.mxu0 0.0
    %253 = vmatmul.mubr.f32.gmra.mrb[0].mxu0 %v54
    %v254 = vpop.f32.mrb[0].mxu0
    %v255 = vadd.f32 0.0, %v254
    %v256 = vpop.f32.mrb[0].mxu0
    %257 = vmatprep.mubr.f32.mxu0 0.0
    %258 = vmatmul.mubr.f32.gmra.mrb[0].mxu0 %v55
    %v259 = vpop.f32.mrb[0].mxu0
    %v260 = vadd.f32 0.0, %v259
    %v261 = vpop.f32.mrb[0].mxu0
    %262 = vmatprep.mubr.f32.mxu0 0.0
    %263 = vmatmul.mubr.f32.gmra.mrb[0].mxu0 %v56
    %v264 = vpop.f32.mrb[0].mxu0
    %v265 = vadd.f32 0.0, %v264
    %v266 = vpop.f32.mrb[0].mxu0
    %267 = vmatprep.mubr.f32.mxu0 0.0
    %268 = vmatmul.mubr.f32.gmra.mrb[0].mxu0 %v57
    %v269 = vpop.f32.mrb[0].mxu0
    %v270 = vadd.f32 0.0, %v269
    %v271 = vpop.f32.mrb[0].mxu0
    %272 = vmatprep.mubr.f32.mxu0 0.0
    %273 = vmatmul.mubr.f32.gmra.mrb[0].mxu0 %v58
    %v274 = vpop.f32.mrb[0].mxu0
    %v275 = vadd.f32 0.0, %v274
    %v276 = vpop.f32.mrb[0].mxu0
    %277 = vmatprep.mubr.f32.mxu0 0.0
    %278 = vmatmul.mubr.f32.gmra.mrb[0].mxu0 %v59
    %v279 = vpop.f32.mrb[0].mxu0
    %v280 = vadd.f32 0.0, %v279
    %v281 = vpop.f32.mrb[0].mxu0
    %282 = vmatprep.mubr.f32.mxu0 0.0
    %283 = vmatmul.mubr.f32.gmra.mrb[0].mxu0 %v60
    %v284 = vpop.f32.mrb[0].mxu0
    %v285 = vadd.f32 0.0, %v284
    %v286 = vpop.f32.mrb[0].mxu0
    %287 = vmatprep.mubr.f32.mxu0 0.0
    %288 = vmatmul.mubr.f32.gmra.mrb[0].mxu0 %v61
    %v289 = vpop.f32.mrb[0].mxu0
    %v290 = vadd.f32 0.0, %v289
    %v291 = vpop.f32.mrb[0].mxu0
    %292 = vmatprep.mubr.f32.mxu0 0.0
    %293 = vmatmul.mubr.f32.gmra.mrb[0].mxu0 %v62
    %v294 = vpop.f32.mrb[0].mxu0
    %v295 = vadd.f32 0.0, %v294
    %v296 = vpop.f32.mrb[0].mxu0
    %297 = vmatprep.mubr.f32.mxu0 0.0
    %298 = vmatmul.mubr.f32.gmra.mrb[0].mxu0 %v63
    %v299 = vpop.f32.mrb[0].mxu0
    %v300 = vadd.f32 0.0, %v299
    %v301 = vpop.f32.mrb[0].mxu0
    %302 = vmatprep.mubr.f32.mxu0 0.0
    %303 = vmatmul.mubr.f32.gmra.mrb[0].mxu0 %v64
    %v304 = vpop.f32.mrb[0].mxu0
    %v305 = vadd.f32 0.0, %v304
    %v306 = vpop.f32.mrb[0].mxu0
    %307 = vdwg.mxu0
    %v308 = vlaneseq
    %v309 = vshrl.u32 %v308, 7
    %v310 = vadd.s32 %v309, 8
    %v311 = vadd.s32 %v309, 16
    %v312 = vadd.s32 %v309, 24
    %v313 = vadd.s32 %v309, 32
    %v314 = vadd.s32 %v309, 40
    %v315 = vadd.s32 %v309, 48
    %v316 = vadd.s32 %v309, 56
    %v317 = vadd.s32 %v309, 64
    %v318 = vadd.s32 %v309, 72
    %v319 = vadd.s32 %v309, 80
    %v320 = vadd.s32 %v309, 88
    %v321 = vadd.s32 %v309, 96
    %v322 = vadd.s32 %v309, 104
    %v323 = vadd.s32 %v309, 112
    %v324 = vadd.s32 %v309, 120
    %v325 = vadd.s32 %v309, 128
    %v326 = vadd.s32 %v309, 136
    %v327 = vadd.s32 %v309, 144
    %v328 = vadd.s32 %v309, 152
    %v329 = vadd.s32 %v309, 160
    %v330 = vadd.s32 %v309, 168
    %v331 = vadd.s32 %v309, 176
    %v332 = vadd.s32 %v309, 184
    %v333 = vadd.s32 %v309, 192
    %v334 = vadd.s32 %v309, 200
    %v335 = vadd.s32 %v309, 208
    %v336 = vadd.s32 %v309, 216
    %v337 = vadd.s32 %v309, 224
    %v338 = vadd.s32 %v309, 232
    %v339 = vadd.s32 %v309, 240
    %v340 = vadd.s32 %v309, 248
    %v341 = vlaneseq
    %v342 = vshrl.u32 %v341, 7
    %v343 = vsub.s32 0, %v342
    %v344 = vrot.slane %v81, %v343
    %v345 = vlaneseq
    %v346 = vshrl.u32 %v345, 7
    %v347 = vsub.s32 2, %v346
    %v348 = vrot.slane %v81, %v347
    %v349 = vlaneseq
    %v350 = vshrl.u32 %v349, 7
    %v351 = vsub.s32 4, %v350
    %v352 = vrot.slane %v81, %v351
    %v353 = vlaneseq
    %v354 = vshrl.u32 %v353, 7
    %v355 = vsub.s32 6, %v354
    %v356 = vrot.slane %v81, %v355
    %v357 = vlaneseq
    %v358 = vshrl.u32 %v357, 7
    %v359 = vsub.s32 0, %v358
    %v360 = vrot.slane %v344, %v359
    %v361 = vlaneseq
    %v362 = vshrl.u32 %v361, 7
    %v363 = vsub.s32 0, %v362
    %v364 = vrot.slane %v348, %v363
    %v365 = vlaneseq
    %v366 = vshrl.u32 %v365, 7
    %v367 = vsub.s32 0, %v366
    %v368 = vrot.slane %v352, %v367
    %v369 = vlaneseq
    %v370 = vshrl.u32 %v369, 7
    %v371 = vsub.s32 0, %v370
    %v372 = vrot.slane %v356, %v371
    %vm373 = vcmp.eq.s32.totalorder %v309, %v360
    %vm374 = vcmp.eq.s32.totalorder %v309, %v364
    %vm375 = vcmp.eq.s32.totalorder %v309, %v368
    %vm376 = vcmp.eq.s32.totalorder %v309, %v372
    %vm377 = vcmp.eq.s32.totalorder %v310, %v360
    %vm378 = vcmp.eq.s32.totalorder %v310, %v364
    %vm379 = vcmp.eq.s32.totalorder %v310, %v368
    %vm380 = vcmp.eq.s32.totalorder %v310, %v372
    %vm381 = vcmp.eq.s32.totalorder %v311, %v360
    %vm382 = vcmp.eq.s32.totalorder %v311, %v364
    %vm383 = vcmp.eq.s32.totalorder %v311, %v368
    %vm384 = vcmp.eq.s32.totalorder %v311, %v372
    %vm385 = vcmp.eq.s32.totalorder %v312, %v360
    %vm386 = vcmp.eq.s32.totalorder %v312, %v364
    %vm387 = vcmp.eq.s32.totalorder %v312, %v368
    %vm388 = vcmp.eq.s32.totalorder %v312, %v372
    %vm389 = vcmp.eq.s32.totalorder %v313, %v360
    %vm390 = vcmp.eq.s32.totalorder %v313, %v364
    %vm391 = vcmp.eq.s32.totalorder %v313, %v368
    %vm392 = vcmp.eq.s32.totalorder %v313, %v372
    %vm393 = vcmp.eq.s32.totalorder %v314, %v360
    %vm394 = vcmp.eq.s32.totalorder %v314, %v364
    %vm395 = vcmp.eq.s32.totalorder %v314, %v368
    %vm396 = vcmp.eq.s32.totalorder %v314, %v372
    %vm397 = vcmp.eq.s32.totalorder %v315, %v360
    %vm398 = vcmp.eq.s32.totalorder %v315, %v364
    %vm399 = vcmp.eq.s32.totalorder %v315, %v368
    %vm400 = vcmp.eq.s32.totalorder %v315, %v372
    %vm401 = vcmp.eq.s32.totalorder %v316, %v360
    %vm402 = vcmp.eq.s32.totalorder %v316, %v364
    %vm403 = vcmp.eq.s32.totalorder %v316, %v368
    %vm404 = vcmp.eq.s32.totalorder %v316, %v372
    %vm405 = vcmp.eq.s32.totalorder %v317, %v360
    %vm406 = vcmp.eq.s32.totalorder %v317, %v364
    %vm407 = vcmp.eq.s32.totalorder %v317, %v368
    %vm408 = vcmp.eq.s32.totalorder %v317, %v372
    %vm409 = vcmp.eq.s32.totalorder %v318, %v360
    %vm410 = vcmp.eq.s32.totalorder %v318, %v364
    %vm411 = vcmp.eq.s32.totalorder %v318, %v368
    %vm412 = vcmp.eq.s32.totalorder %v318, %v372
    %vm413 = vcmp.eq.s32.totalorder %v319, %v360
    %vm414 = vcmp.eq.s32.totalorder %v319, %v364
    %vm415 = vcmp.eq.s32.totalorder %v319, %v368
    %vm416 = vcmp.eq.s32.totalorder %v319, %v372
    %vm417 = vcmp.eq.s32.totalorder %v320, %v360
    %vm418 = vcmp.eq.s32.totalorder %v320, %v364
    %vm419 = vcmp.eq.s32.totalorder %v320, %v368
    %vm420 = vcmp.eq.s32.totalorder %v320, %v372
    %vm421 = vcmp.eq.s32.totalorder %v321, %v360
    %vm422 = vcmp.eq.s32.totalorder %v321, %v364
    %vm423 = vcmp.eq.s32.totalorder %v321, %v368
    %vm424 = vcmp.eq.s32.totalorder %v321, %v372
    %vm425 = vcmp.eq.s32.totalorder %v322, %v360
    %vm426 = vcmp.eq.s32.totalorder %v322, %v364
    %vm427 = vcmp.eq.s32.totalorder %v322, %v368
    %vm428 = vcmp.eq.s32.totalorder %v322, %v372
    %vm429 = vcmp.eq.s32.totalorder %v323, %v360
    %vm430 = vcmp.eq.s32.totalorder %v323, %v364
    %vm431 = vcmp.eq.s32.totalorder %v323, %v368
    %vm432 = vcmp.eq.s32.totalorder %v323, %v372
    %vm433 = vcmp.eq.s32.totalorder %v324, %v360
    %vm434 = vcmp.eq.s32.totalorder %v324, %v364
    %vm435 = vcmp.eq.s32.totalorder %v324, %v368
    %vm436 = vcmp.eq.s32.totalorder %v324, %v372
    %vm437 = vcmp.eq.s32.totalorder %v325, %v360
    %vm438 = vcmp.eq.s32.totalorder %v325, %v364
    %vm439 = vcmp.eq.s32.totalorder %v325, %v368
    %vm440 = vcmp.eq.s32.totalorder %v325, %v372
    %vm441 = vcmp.eq.s32.totalorder %v326, %v360
    %vm442 = vcmp.eq.s32.totalorder %v326, %v364
    %vm443 = vcmp.eq.s32.totalorder %v326, %v368
    %vm444 = vcmp.eq.s32.totalorder %v326, %v372
    %vm445 = vcmp.eq.s32.totalorder %v327, %v360
    %vm446 = vcmp.eq.s32.totalorder %v327, %v364
    %vm447 = vcmp.eq.s32.totalorder %v327, %v368
    %vm448 = vcmp.eq.s32.totalorder %v327, %v372
    %vm449 = vcmp.eq.s32.totalorder %v328, %v360
    %vm450 = vcmp.eq.s32.totalorder %v328, %v364
    %vm451 = vcmp.eq.s32.totalorder %v328, %v368
    %vm452 = vcmp.eq.s32.totalorder %v328, %v372
    %vm453 = vcmp.eq.s32.totalorder %v329, %v360
    %vm454 = vcmp.eq.s32.totalorder %v329, %v364
    %vm455 = vcmp.eq.s32.totalorder %v329, %v368
    %vm456 = vcmp.eq.s32.totalorder %v329, %v372
    %vm457 = vcmp.eq.s32.totalorder %v330, %v360
    %vm458 = vcmp.eq.s32.totalorder %v330, %v364
    %vm459 = vcmp.eq.s32.totalorder %v330, %v368
    %vm460 = vcmp.eq.s32.totalorder %v330, %v372
    %vm461 = vcmp.eq.s32.totalorder %v331, %v360
    %vm462 = vcmp.eq.s32.totalorder %v331, %v364
    %vm463 = vcmp.eq.s32.totalorder %v331, %v368
    %vm464 = vcmp.eq.s32.totalorder %v331, %v372
    %vm465 = vcmp.eq.s32.totalorder %v332, %v360
    %vm466 = vcmp.eq.s32.totalorder %v332, %v364
    %vm467 = vcmp.eq.s32.totalorder %v332, %v368
    %vm468 = vcmp.eq.s32.totalorder %v332, %v372
    %vm469 = vcmp.eq.s32.totalorder %v333, %v360
    %vm470 = vcmp.eq.s32.totalorder %v333, %v364
    %vm471 = vcmp.eq.s32.totalorder %v333, %v368
    %vm472 = vcmp.eq.s32.totalorder %v333, %v372
    %vm473 = vcmp.eq.s32.totalorder %v334, %v360
    %vm474 = vcmp.eq.s32.totalorder %v334, %v364
    %vm475 = vcmp.eq.s32.totalorder %v334, %v368
    %vm476 = vcmp.eq.s32.totalorder %v334, %v372
    %vm477 = vcmp.eq.s32.totalorder %v335, %v360
    %vm478 = vcmp.eq.s32.totalorder %v335, %v364
    %vm479 = vcmp.eq.s32.totalorder %v335, %v368
    %vm480 = vcmp.eq.s32.totalorder %v335, %v372
    %vm481 = vcmp.eq.s32.totalorder %v336, %v360
    %vm482 = vcmp.eq.s32.totalorder %v336, %v364
    %vm483 = vcmp.eq.s32.totalorder %v336, %v368
    %vm484 = vcmp.eq.s32.totalorder %v336, %v372
    %vm485 = vcmp.eq.s32.totalorder %v337, %v360
    %vm486 = vcmp.eq.s32.totalorder %v337, %v364
    %vm487 = vcmp.eq.s32.totalorder %v337, %v368
    %vm488 = vcmp.eq.s32.totalorder %v337, %v372
    %vm489 = vcmp.eq.s32.totalorder %v338, %v360
    %vm490 = vcmp.eq.s32.totalorder %v338, %v364
    %vm491 = vcmp.eq.s32.totalorder %v338, %v368
    %vm492 = vcmp.eq.s32.totalorder %v338, %v372
    %vm493 = vcmp.eq.s32.totalorder %v339, %v360
    %vm494 = vcmp.eq.s32.totalorder %v339, %v364
    %vm495 = vcmp.eq.s32.totalorder %v339, %v368
    %vm496 = vcmp.eq.s32.totalorder %v339, %v372
    %vm497 = vcmp.eq.s32.totalorder %v340, %v360
    %vm498 = vcmp.eq.s32.totalorder %v340, %v364
    %vm499 = vcmp.eq.s32.totalorder %v340, %v368
    %vm500 = vcmp.eq.s32.totalorder %v340, %v372
    %v501 = vlaneseq
    %v502 = vshrl.u32 %v501, 7
    %v503 = vsub.s32 1, %v502
    %v504 = vrot.slane %v81, %v503
    %v505 = vlaneseq
    %v506 = vshrl.u32 %v505, 7
    %v507 = vsub.s32 3, %v506
    %v508 = vrot.slane %v81, %v507
    %v509 = vlaneseq
    %v510 = vshrl.u32 %v509, 7
    %v511 = vsub.s32 5, %v510
    %v512 = vrot.slane %v81, %v511
    %v513 = vlaneseq
    %v514 = vshrl.u32 %v513, 7
    %v515 = vsub.s32 7, %v514
    %v516 = vrot.slane %v81, %v515
    %v517 = vlaneseq
    %v518 = vshrl.u32 %v517, 7
    %v519 = vsub.s32 1, %v518
    %v520 = vrot.slane %v504, %v519
    %v521 = vlaneseq
    %v522 = vshrl.u32 %v521, 7
    %v523 = vsub.s32 1, %v522
    %v524 = vrot.slane %v508, %v523
    %v525 = vlaneseq
    %v526 = vshrl.u32 %v525, 7
    %v527 = vsub.s32 1, %v526
    %v528 = vrot.slane %v512, %v527
    %v529 = vlaneseq
    %v530 = vshrl.u32 %v529, 7
    %v531 = vsub.s32 1, %v530
    %v532 = vrot.slane %v516, %v531
    %vm533 = vcmp.eq.s32.totalorder %v309, %v520
    %vm534 = vcmp.eq.s32.totalorder %v309, %v524
    %vm535 = vcmp.eq.s32.totalorder %v309, %v528
    %vm536 = vcmp.eq.s32.totalorder %v309, %v532
    %vm537 = vcmp.eq.s32.totalorder %v310, %v520
    %vm538 = vcmp.eq.s32.totalorder %v310, %v524
    %vm539 = vcmp.eq.s32.totalorder %v310, %v528
    %vm540 = vcmp.eq.s32.totalorder %v310, %v532
    %vm541 = vcmp.eq.s32.totalorder %v311, %v520
    %vm542 = vcmp.eq.s32.totalorder %v311, %v524
    %vm543 = vcmp.eq.s32.totalorder %v311, %v528
    %vm544 = vcmp.eq.s32.totalorder %v311, %v532
    %vm545 = vcmp.eq.s32.totalorder %v312, %v520
    %vm546 = vcmp.eq.s32.totalorder %v312, %v524
    %vm547 = vcmp.eq.s32.totalorder %v312, %v528
    %vm548 = vcmp.eq.s32.totalorder %v312, %v532
    %vm549 = vcmp.eq.s32.totalorder %v313, %v520
    %vm550 = vcmp.eq.s32.totalorder %v313, %v524
    %vm551 = vcmp.eq.s32.totalorder %v313, %v528
    %vm552 = vcmp.eq.s32.totalorder %v313, %v532
    %vm553 = vcmp.eq.s32.totalorder %v314, %v520
    %vm554 = vcmp.eq.s32.totalorder %v314, %v524
    %vm555 = vcmp.eq.s32.totalorder %v314, %v528
    %vm556 = vcmp.eq.s32.totalorder %v314, %v532
    %vm557 = vcmp.eq.s32.totalorder %v315, %v520
    %vm558 = vcmp.eq.s32.totalorder %v315, %v524
    %vm559 = vcmp.eq.s32.totalorder %v315, %v528
    %vm560 = vcmp.eq.s32.totalorder %v315, %v532
    %vm561 = vcmp.eq.s32.totalorder %v316, %v520
    %vm562 = vcmp.eq.s32.totalorder %v316, %v524
    %vm563 = vcmp.eq.s32.totalorder %v316, %v528
    %vm564 = vcmp.eq.s32.totalorder %v316, %v532
    %vm565 = vcmp.eq.s32.totalorder %v317, %v520
    %vm566 = vcmp.eq.s32.totalorder %v317, %v524
    %vm567 = vcmp.eq.s32.totalorder %v317, %v528
    %vm568 = vcmp.eq.s32.totalorder %v317, %v532
    %vm569 = vcmp.eq.s32.totalorder %v318, %v520
    %vm570 = vcmp.eq.s32.totalorder %v318, %v524
    %vm571 = vcmp.eq.s32.totalorder %v318, %v528
    %vm572 = vcmp.eq.s32.totalorder %v318, %v532
    %vm573 = vcmp.eq.s32.totalorder %v319, %v520
    %vm574 = vcmp.eq.s32.totalorder %v319, %v524
    %vm575 = vcmp.eq.s32.totalorder %v319, %v528
    %vm576 = vcmp.eq.s32.totalorder %v319, %v532
    %vm577 = vcmp.eq.s32.totalorder %v320, %v520
    %vm578 = vcmp.eq.s32.totalorder %v320, %v524
    %vm579 = vcmp.eq.s32.totalorder %v320, %v528
    %vm580 = vcmp.eq.s32.totalorder %v320, %v532
    %vm581 = vcmp.eq.s32.totalorder %v321, %v520
    %vm582 = vcmp.eq.s32.totalorder %v321, %v524
    %vm583 = vcmp.eq.s32.totalorder %v321, %v528
    %vm584 = vcmp.eq.s32.totalorder %v321, %v532
    %vm585 = vcmp.eq.s32.totalorder %v322, %v520
    %vm586 = vcmp.eq.s32.totalorder %v322, %v524
    %vm587 = vcmp.eq.s32.totalorder %v322, %v528
    %vm588 = vcmp.eq.s32.totalorder %v322, %v532
    %vm589 = vcmp.eq.s32.totalorder %v323, %v520
    %vm590 = vcmp.eq.s32.totalorder %v323, %v524
    %vm591 = vcmp.eq.s32.totalorder %v323, %v528
    %vm592 = vcmp.eq.s32.totalorder %v323, %v532
    %vm593 = vcmp.eq.s32.totalorder %v324, %v520
    %vm594 = vcmp.eq.s32.totalorder %v324, %v524
    %vm595 = vcmp.eq.s32.totalorder %v324, %v528
    %vm596 = vcmp.eq.s32.totalorder %v324, %v532
    %vm597 = vcmp.eq.s32.totalorder %v325, %v520
    %vm598 = vcmp.eq.s32.totalorder %v325, %v524
    %vm599 = vcmp.eq.s32.totalorder %v325, %v528
    %vm600 = vcmp.eq.s32.totalorder %v325, %v532
    %vm601 = vcmp.eq.s32.totalorder %v326, %v520
    %vm602 = vcmp.eq.s32.totalorder %v326, %v524
    %vm603 = vcmp.eq.s32.totalorder %v326, %v528
    %vm604 = vcmp.eq.s32.totalorder %v326, %v532
    %vm605 = vcmp.eq.s32.totalorder %v327, %v520
    %vm606 = vcmp.eq.s32.totalorder %v327, %v524
    %vm607 = vcmp.eq.s32.totalorder %v327, %v528
    %vm608 = vcmp.eq.s32.totalorder %v327, %v532
    %vm609 = vcmp.eq.s32.totalorder %v328, %v520
    %vm610 = vcmp.eq.s32.totalorder %v328, %v524
    %vm611 = vcmp.eq.s32.totalorder %v328, %v528
    %vm612 = vcmp.eq.s32.totalorder %v328, %v532
    %vm613 = vcmp.eq.s32.totalorder %v329, %v520
    %vm614 = vcmp.eq.s32.totalorder %v329, %v524
    %vm615 = vcmp.eq.s32.totalorder %v329, %v528
    %vm616 = vcmp.eq.s32.totalorder %v329, %v532
    %vm617 = vcmp.eq.s32.totalorder %v330, %v520
    %vm618 = vcmp.eq.s32.totalorder %v330, %v524
    %vm619 = vcmp.eq.s32.totalorder %v330, %v528
    %vm620 = vcmp.eq.s32.totalorder %v330, %v532
    %vm621 = vcmp.eq.s32.totalorder %v331, %v520
    %vm622 = vcmp.eq.s32.totalorder %v331, %v524
    %vm623 = vcmp.eq.s32.totalorder %v331, %v528
    %vm624 = vcmp.eq.s32.totalorder %v331, %v532
    %vm625 = vcmp.eq.s32.totalorder %v332, %v520
    %vm626 = vcmp.eq.s32.totalorder %v332, %v524
    %vm627 = vcmp.eq.s32.totalorder %v332, %v528
    %vm628 = vcmp.eq.s32.totalorder %v332, %v532
    %vm629 = vcmp.eq.s32.totalorder %v333, %v520
    %vm630 = vcmp.eq.s32.totalorder %v333, %v524
    %vm631 = vcmp.eq.s32.totalorder %v333, %v528
    %vm632 = vcmp.eq.s32.totalorder %v333, %v532
    %vm633 = vcmp.eq.s32.totalorder %v334, %v520
    %vm634 = vcmp.eq.s32.totalorder %v334, %v524
    %vm635 = vcmp.eq.s32.totalorder %v334, %v528
    %vm636 = vcmp.eq.s32.totalorder %v334, %v532
    %vm637 = vcmp.eq.s32.totalorder %v335, %v520
    %vm638 = vcmp.eq.s32.totalorder %v335, %v524
    %vm639 = vcmp.eq.s32.totalorder %v335, %v528
    %vm640 = vcmp.eq.s32.totalorder %v335, %v532
    %vm641 = vcmp.eq.s32.totalorder %v336, %v520
    %vm642 = vcmp.eq.s32.totalorder %v336, %v524
    %vm643 = vcmp.eq.s32.totalorder %v336, %v528
    %vm644 = vcmp.eq.s32.totalorder %v336, %v532
    %vm645 = vcmp.eq.s32.totalorder %v337, %v520
    %vm646 = vcmp.eq.s32.totalorder %v337, %v524
    %vm647 = vcmp.eq.s32.totalorder %v337, %v528
    %vm648 = vcmp.eq.s32.totalorder %v337, %v532
    %vm649 = vcmp.eq.s32.totalorder %v338, %v520
    %vm650 = vcmp.eq.s32.totalorder %v338, %v524
    %vm651 = vcmp.eq.s32.totalorder %v338, %v528
    %vm652 = vcmp.eq.s32.totalorder %v338, %v532
    %vm653 = vcmp.eq.s32.totalorder %v339, %v520
    %vm654 = vcmp.eq.s32.totalorder %v339, %v524
    %vm655 = vcmp.eq.s32.totalorder %v339, %v528
    %vm656 = vcmp.eq.s32.totalorder %v339, %v532
    %vm657 = vcmp.eq.s32.totalorder %v340, %v520
    %vm658 = vcmp.eq.s32.totalorder %v340, %v524
    %vm659 = vcmp.eq.s32.totalorder %v340, %v528
    %vm660 = vcmp.eq.s32.totalorder %v340, %v532
    %v661 = vlaneseq
    %v662 = vand.u32 %v661, 127
    %v663 = vadd.s32 %v662, 128
    %v664 = vadd.s32 %v662, 256
    %v665 = vadd.s32 %v662, 384
    %vm666 = vcmp.lt.s32.totalorder %v662, 512
    %vm667 = vcmp.lt.s32.totalorder %v663, 512
    %vm668 = vcmp.lt.s32.totalorder %v664, 512
    %vm669 = vcmp.lt.s32.totalorder %v665, 512
    %671 = vset.pattern.permute.xlu0 0
    %672 = vperm.xlu0 %671, %v150
    %v673 = vpop.permute.xlu0 %672
    %676 = vset.pattern.permute.xlu0 0
    %677 = vperm.xlu0 %676, %v155
    %v678 = vpop.permute.xlu0 %677
    %681 = vset.pattern.permute.xlu0 0
    %682 = vperm.xlu0 %681, %v160
    %v683 = vpop.permute.xlu0 %682
    %686 = vset.pattern.permute.xlu0 0
    %687 = vperm.xlu0 %686, %v165
    %v688 = vpop.permute.xlu0 %687
    %691 = vset.pattern.permute.xlu0 0
    %692 = vperm.xlu0 %691, %v170
    %v693 = vpop.permute.xlu0 %692
    %696 = vset.pattern.permute.xlu0 0
    %697 = vperm.xlu0 %696, %v175
    %v698 = vpop.permute.xlu0 %697
    %701 = vset.pattern.permute.xlu0 0
    %702 = vperm.xlu0 %701, %v180
    %v703 = vpop.permute.xlu0 %702
    %706 = vset.pattern.permute.xlu0 0
    %707 = vperm.xlu0 %706, %v185
    %v708 = vpop.permute.xlu0 %707
    %711 = vset.pattern.permute.xlu0 0
    %712 = vperm.xlu0 %711, %v190
    %v713 = vpop.permute.xlu0 %712
    %716 = vset.pattern.permute.xlu0 0
    %717 = vperm.xlu0 %716, %v195
    %v718 = vpop.permute.xlu0 %717
    %721 = vset.pattern.permute.xlu0 0
    %722 = vperm.xlu0 %721, %v200
    %v723 = vpop.permute.xlu0 %722
    %726 = vset.pattern.permute.xlu0 0
    %727 = vperm.xlu0 %726, %v205
    %v728 = vpop.permute.xlu0 %727
    %731 = vset.pattern.permute.xlu0 0
    %732 = vperm.xlu0 %731, %v210
    %v733 = vpop.permute.xlu0 %732
    %736 = vset.pattern.permute.xlu0 0
    %737 = vperm.xlu0 %736, %v215
    %v738 = vpop.permute.xlu0 %737
    %741 = vset.pattern.permute.xlu0 0
    %742 = vperm.xlu0 %741, %v220
    %v743 = vpop.permute.xlu0 %742
    %746 = vset.pattern.permute.xlu0 0
    %747 = vperm.xlu0 %746, %v225
    %v748 = vpop.permute.xlu0 %747
    %751 = vset.pattern.permute.xlu0 0
    %752 = vperm.xlu0 %751, %v230
    %v753 = vpop.permute.xlu0 %752
    %756 = vset.pattern.permute.xlu0 0
    %757 = vperm.xlu0 %756, %v235
    %v758 = vpop.permute.xlu0 %757
    %761 = vset.pattern.permute.xlu0 0
    %762 = vperm.xlu0 %761, %v240
    %v763 = vpop.permute.xlu0 %762
    %766 = vset.pattern.permute.xlu0 0
    %767 = vperm.xlu0 %766, %v245
    %v768 = vpop.permute.xlu0 %767
    %771 = vset.pattern.permute.xlu0 0
    %772 = vperm.xlu0 %771, %v250
    %v773 = vpop.permute.xlu0 %772
    %776 = vset.pattern.permute.xlu0 0
    %777 = vperm.xlu0 %776, %v255
    %v778 = vpop.permute.xlu0 %777
    %781 = vset.pattern.permute.xlu0 0
    %782 = vperm.xlu0 %781, %v260
    %v783 = vpop.permute.xlu0 %782
    %786 = vset.pattern.permute.xlu0 0
    %787 = vperm.xlu0 %786, %v265
    %v788 = vpop.permute.xlu0 %787
    %791 = vset.pattern.permute.xlu0 0
    %792 = vperm.xlu0 %791, %v270
    %v793 = vpop.permute.xlu0 %792
    %796 = vset.pattern.permute.xlu0 0
    %797 = vperm.xlu0 %796, %v275
    %v798 = vpop.permute.xlu0 %797
    %801 = vset.pattern.permute.xlu0 0
    %802 = vperm.xlu0 %801, %v280
    %v803 = vpop.permute.xlu0 %802
    %806 = vset.pattern.permute.xlu0 0
    %807 = vperm.xlu0 %806, %v285
    %v808 = vpop.permute.xlu0 %807
    %811 = vset.pattern.permute.xlu0 0
    %812 = vperm.xlu0 %811, %v290
    %v813 = vpop.permute.xlu0 %812
    %816 = vset.pattern.permute.xlu0 0
    %817 = vperm.xlu0 %816, %v295
    %v818 = vpop.permute.xlu0 %817
    %821 = vset.pattern.permute.xlu0 0
    %822 = vperm.xlu0 %821, %v300
    %v823 = vpop.permute.xlu0 %822
    %826 = vset.pattern.permute.xlu0 0
    %827 = vperm.xlu0 %826, %v305
    %v828 = vpop.permute.xlu0 %827
    %v830 = vsel %vm373, %v673, 0.0
    %v831 = vsel %vm374, %v673, 0.0
    %v832 = vsel %vm375, %v673, 0.0
    %v833 = vsel %vm376, %v673, 0.0
    %v834 = vsel %vm377, %v678, 0.0
    %v835 = vsel %vm378, %v678, 0.0
    %v836 = vsel %vm379, %v678, 0.0
    %v837 = vsel %vm380, %v678, 0.0
    %v838 = vsel %vm381, %v683, 0.0
    %v839 = vsel %vm382, %v683, 0.0
    %v840 = vsel %vm383, %v683, 0.0
    %v841 = vsel %vm384, %v683, 0.0
    %v842 = vsel %vm385, %v688, 0.0
    %v843 = vsel %vm386, %v688, 0.0
    %v844 = vsel %vm387, %v688, 0.0
    %v845 = vsel %vm388, %v688, 0.0
    %v846 = vsel %vm389, %v693, 0.0
    %v847 = vsel %vm390, %v693, 0.0
    %v848 = vsel %vm391, %v693, 0.0
    %v849 = vsel %vm392, %v693, 0.0
    %v850 = vsel %vm393, %v698, 0.0
    %v851 = vsel %vm394, %v698, 0.0
    %v852 = vsel %vm395, %v698, 0.0
    %v853 = vsel %vm396, %v698, 0.0
    %v854 = vsel %vm397, %v703, 0.0
    %v855 = vsel %vm398, %v703, 0.0
    %v856 = vsel %vm399, %v703, 0.0
    %v857 = vsel %vm400, %v703, 0.0
    %v858 = vsel %vm401, %v708, 0.0
    %v859 = vsel %vm402, %v708, 0.0
    %v860 = vsel %vm403, %v708, 0.0
    %v861 = vsel %vm404, %v708, 0.0
    %v862 = vsel %vm405, %v713, 0.0
    %v863 = vsel %vm406, %v713, 0.0
    %v864 = vsel %vm407, %v713, 0.0
    %v865 = vsel %vm408, %v713, 0.0
    %v866 = vsel %vm409, %v718, 0.0
    %v867 = vsel %vm410, %v718, 0.0
    %v868 = vsel %vm411, %v718, 0.0
    %v869 = vsel %vm412, %v718, 0.0
    %v870 = vsel %vm413, %v723, 0.0
    %v871 = vsel %vm414, %v723, 0.0
    %v872 = vsel %vm415, %v723, 0.0
    %v873 = vsel %vm416, %v723, 0.0
    %v874 = vsel %vm417, %v728, 0.0
    %v875 = vsel %vm418, %v728, 0.0
    %v876 = vsel %vm419, %v728, 0.0
    %v877 = vsel %vm420, %v728, 0.0
    %v878 = vsel %vm421, %v733, 0.0
    %v879 = vsel %vm422, %v733, 0.0
    %v880 = vsel %vm423, %v733, 0.0
    %v881 = vsel %vm424, %v733, 0.0
    %v882 = vsel %vm425, %v738, 0.0
    %v883 = vsel %vm426, %v738, 0.0
    %v884 = vsel %vm427, %v738, 0.0
    %v885 = vsel %vm428, %v738, 0.0
    %v886 = vsel %vm429, %v743, 0.0
    %v887 = vsel %vm430, %v743, 0.0
    %v888 = vsel %vm431, %v743, 0.0
    %v889 = vsel %vm432, %v743, 0.0
    %v890 = vsel %vm433, %v748, 0.0
    %v891 = vsel %vm434, %v748, 0.0
    %v892 = vsel %vm435, %v748, 0.0
    %v893 = vsel %vm436, %v748, 0.0
    %v894 = vsel %vm437, %v753, 0.0
    %v895 = vsel %vm438, %v753, 0.0
    %v896 = vsel %vm439, %v753, 0.0
    %v897 = vsel %vm440, %v753, 0.0
    %v898 = vsel %vm441, %v758, 0.0
    %v899 = vsel %vm442, %v758, 0.0
    %v900 = vsel %vm443, %v758, 0.0
    %v901 = vsel %vm444, %v758, 0.0
    %v902 = vsel %vm445, %v763, 0.0
    %v903 = vsel %vm446, %v763, 0.0
    %v904 = vsel %vm447, %v763, 0.0
    %v905 = vsel %vm448, %v763, 0.0
    %v906 = vsel %vm449, %v768, 0.0
    %v907 = vsel %vm450, %v768, 0.0
    %v908 = vsel %vm451, %v768, 0.0
    %v909 = vsel %vm452, %v768, 0.0
    %v910 = vsel %vm453, %v773, 0.0
    %v911 = vsel %vm454, %v773, 0.0
    %v912 = vsel %vm455, %v773, 0.0
    %v913 = vsel %vm456, %v773, 0.0
    %v914 = vsel %vm457, %v778, 0.0
    %v915 = vsel %vm458, %v778, 0.0
    %v916 = vsel %vm459, %v778, 0.0
    %v917 = vsel %vm460, %v778, 0.0
    %v918 = vsel %vm461, %v783, 0.0
    %v919 = vsel %vm462, %v783, 0.0
    %v920 = vsel %vm463, %v783, 0.0
    %v921 = vsel %vm464, %v783, 0.0
    %v922 = vsel %vm465, %v788, 0.0
    %v923 = vsel %vm466, %v788, 0.0
    %v924 = vsel %vm467, %v788, 0.0
    %v925 = vsel %vm468, %v788, 0.0
    %v926 = vsel %vm469, %v793, 0.0
    %v927 = vsel %vm470, %v793, 0.0
    %v928 = vsel %vm471, %v793, 0.0
    %v929 = vsel %vm472, %v793, 0.0
    %v930 = vsel %vm473, %v798, 0.0
    %v931 = vsel %vm474, %v798, 0.0
    %v932 = vsel %vm475, %v798, 0.0
    %v933 = vsel %vm476, %v798, 0.0
    %v934 = vsel %vm477, %v803, 0.0
    %v935 = vsel %vm478, %v803, 0.0
    %v936 = vsel %vm479, %v803, 0.0
    %v937 = vsel %vm480, %v803, 0.0
    %v938 = vsel %vm481, %v808, 0.0
    %v939 = vsel %vm482, %v808, 0.0
    %v940 = vsel %vm483, %v808, 0.0
    %v941 = vsel %vm484, %v808, 0.0
    %v942 = vsel %vm485, %v813, 0.0
    %v943 = vsel %vm486, %v813, 0.0
    %v944 = vsel %vm487, %v813, 0.0
    %v945 = vsel %vm488, %v813, 0.0
    %v946 = vsel %vm489, %v818, 0.0
    %v947 = vsel %vm490, %v818, 0.0
    %v948 = vsel %vm491, %v818, 0.0
    %v949 = vsel %vm492, %v818, 0.0
    %v950 = vsel %vm493, %v823, 0.0
    %v951 = vsel %vm494, %v823, 0.0
    %v952 = vsel %vm495, %v823, 0.0
    %v953 = vsel %vm496, %v823, 0.0
    %v954 = vsel %vm497, %v828, 0.0
    %v955 = vsel %vm498, %v828, 0.0
    %v956 = vsel %vm499, %v828, 0.0
    %v957 = vsel %vm500, %v828, 0.0
    %958 = vset.pattern.permute.xlu0 1
    %959 = vperm.xlu0 %958, %v150
    %v960 = vpop.permute.xlu0 %959
    %962 = vset.pattern.permute.xlu0 1
    %963 = vperm.xlu0 %962, %v155
    %v964 = vpop.permute.xlu0 %963
    %966 = vset.pattern.permute.xlu0 1
    %967 = vperm.xlu0 %966, %v160
    %v968 = vpop.permute.xlu0 %967
    %970 = vset.pattern.permute.xlu0 1
    %971 = vperm.xlu0 %970, %v165
    %v972 = vpop.permute.xlu0 %971
    %974 = vset.pattern.permute.xlu0 1
    %975 = vperm.xlu0 %974, %v170
    %v976 = vpop.permute.xlu0 %975
    %978 = vset.pattern.permute.xlu0 1
    %979 = vperm.xlu0 %978, %v175
    %v980 = vpop.permute.xlu0 %979
    %982 = vset.pattern.permute.xlu0 1
    %983 = vperm.xlu0 %982, %v180
    %v984 = vpop.permute.xlu0 %983
    %986 = vset.pattern.permute.xlu0 1
    %987 = vperm.xlu0 %986, %v185
    %v988 = vpop.permute.xlu0 %987
    %990 = vset.pattern.permute.xlu0 1
    %991 = vperm.xlu0 %990, %v190
    %v992 = vpop.permute.xlu0 %991
    %994 = vset.pattern.permute.xlu0 1
    %995 = vperm.xlu0 %994, %v195
    %v996 = vpop.permute.xlu0 %995
    %998 = vset.pattern.permute.xlu0 1
    %999 = vperm.xlu0 %998, %v200
    %v1000 = vpop.permute.xlu0 %999
    %1002 = vset.pattern.permute.xlu0 1
    %1003 = vperm.xlu0 %1002, %v205
    %v1004 = vpop.permute.xlu0 %1003
    %1006 = vset.pattern.permute.xlu0 1
    %1007 = vperm.xlu0 %1006, %v210
    %v1008 = vpop.permute.xlu0 %1007
    %1010 = vset.pattern.permute.xlu0 1
    %1011 = vperm.xlu0 %1010, %v215
    %v1012 = vpop.permute.xlu0 %1011
    %1014 = vset.pattern.permute.xlu0 1
    %1015 = vperm.xlu0 %1014, %v220
    %v1016 = vpop.permute.xlu0 %1015
    %1018 = vset.pattern.permute.xlu0 1
    %1019 = vperm.xlu0 %1018, %v225
    %v1020 = vpop.permute.xlu0 %1019
    %1022 = vset.pattern.permute.xlu0 1
    %1023 = vperm.xlu0 %1022, %v230
    %v1024 = vpop.permute.xlu0 %1023
    %1026 = vset.pattern.permute.xlu0 1
    %1027 = vperm.xlu0 %1026, %v235
    %v1028 = vpop.permute.xlu0 %1027
    %1030 = vset.pattern.permute.xlu0 1
    %1031 = vperm.xlu0 %1030, %v240
    %v1032 = vpop.permute.xlu0 %1031
    %1034 = vset.pattern.permute.xlu0 1
    %1035 = vperm.xlu0 %1034, %v245
    %v1036 = vpop.permute.xlu0 %1035
    %1038 = vset.pattern.permute.xlu0 1
    %1039 = vperm.xlu0 %1038, %v250
    %v1040 = vpop.permute.xlu0 %1039
    %1042 = vset.pattern.permute.xlu0 1
    %1043 = vperm.xlu0 %1042, %v255
    %v1044 = vpop.permute.xlu0 %1043
    %1046 = vset.pattern.permute.xlu0 1
    %1047 = vperm.xlu0 %1046, %v260
    %v1048 = vpop.permute.xlu0 %1047
    %1050 = vset.pattern.permute.xlu0 1
    %1051 = vperm.xlu0 %1050, %v265
    %v1052 = vpop.permute.xlu0 %1051
    %1054 = vset.pattern.permute.xlu0 1
    %1055 = vperm.xlu0 %1054, %v270
    %v1056 = vpop.permute.xlu0 %1055
    %1058 = vset.pattern.permute.xlu0 1
    %1059 = vperm.xlu0 %1058, %v275
    %v1060 = vpop.permute.xlu0 %1059
    %1062 = vset.pattern.permute.xlu0 1
    %1063 = vperm.xlu0 %1062, %v280
    %v1064 = vpop.permute.xlu0 %1063
    %1066 = vset.pattern.permute.xlu0 1
    %1067 = vperm.xlu0 %1066, %v285
    %v1068 = vpop.permute.xlu0 %1067
    %1070 = vset.pattern.permute.xlu0 1
    %1071 = vperm.xlu0 %1070, %v290
    %v1072 = vpop.permute.xlu0 %1071
    %1074 = vset.pattern.permute.xlu0 1
    %1075 = vperm.xlu0 %1074, %v295
    %v1076 = vpop.permute.xlu0 %1075
    %1078 = vset.pattern.permute.xlu0 1
    %1079 = vperm.xlu0 %1078, %v300
    %v1080 = vpop.permute.xlu0 %1079
    %1082 = vset.pattern.permute.xlu0 1
    %1083 = vperm.xlu0 %1082, %v305
    %v1084 = vpop.permute.xlu0 %1083
    %v1086 = vsel %vm533, %v960, 0.0
    %v1087 = vsel %vm534, %v960, 0.0
    %v1088 = vsel %vm535, %v960, 0.0
    %v1089 = vsel %vm536, %v960, 0.0
    %v1090 = vsel %vm537, %v964, 0.0
    %v1091 = vsel %vm538, %v964, 0.0
    %v1092 = vsel %vm539, %v964, 0.0
    %v1093 = vsel %vm540, %v964, 0.0
    %v1094 = vsel %vm541, %v968, 0.0
    %v1095 = vsel %vm542, %v968, 0.0
    %v1096 = vsel %vm543, %v968, 0.0
    %v1097 = vsel %vm544, %v968, 0.0
    %v1098 = vsel %vm545, %v972, 0.0
    %v1099 = vsel %vm546, %v972, 0.0
    %v1100 = vsel %vm547, %v972, 0.0
    %v1101 = vsel %vm548, %v972, 0.0
    %v1102 = vsel %vm549, %v976, 0.0
    %v1103 = vsel %vm550, %v976, 0.0
    %v1104 = vsel %vm551, %v976, 0.0
    %v1105 = vsel %vm552, %v976, 0.0
    %v1106 = vsel %vm553, %v980, 0.0
    %v1107 = vsel %vm554, %v980, 0.0
    %v1108 = vsel %vm555, %v980, 0.0
    %v1109 = vsel %vm556, %v980, 0.0
    %v1110 = vsel %vm557, %v984, 0.0
    %v1111 = vsel %vm558, %v984, 0.0
    %v1112 = vsel %vm559, %v984, 0.0
    %v1113 = vsel %vm560, %v984, 0.0
    %v1114 = vsel %vm561, %v988, 0.0
    %v1115 = vsel %vm562, %v988, 0.0
    %v1116 = vsel %vm563, %v988, 0.0
    %v1117 = vsel %vm564, %v988, 0.0
    %v1118 = vsel %vm565, %v992, 0.0
    %v1119 = vsel %vm566, %v992, 0.0
    %v1120 = vsel %vm567, %v992, 0.0
    %v1121 = vsel %vm568, %v992, 0.0
    %v1122 = vsel %vm569, %v996, 0.0
    %v1123 = vsel %vm570, %v996, 0.0
    %v1124 = vsel %vm571, %v996, 0.0
    %v1125 = vsel %vm572, %v996, 0.0
    %v1126 = vsel %vm573, %v1000, 0.0
    %v1127 = vsel %vm574, %v1000, 0.0
    %v1128 = vsel %vm575, %v1000, 0.0
    %v1129 = vsel %vm576, %v1000, 0.0
    %v1130 = vsel %vm577, %v1004, 0.0
    %v1131 = vsel %vm578, %v1004, 0.0
    %v1132 = vsel %vm579, %v1004, 0.0
    %v1133 = vsel %vm580, %v1004, 0.0
    %v1134 = vsel %vm581, %v1008, 0.0
    %v1135 = vsel %vm582, %v1008, 0.0
    %v1136 = vsel %vm583, %v1008, 0.0
    %v1137 = vsel %vm584, %v1008, 0.0
    %v1138 = vsel %vm585, %v1012, 0.0
    %v1139 = vsel %vm586, %v1012, 0.0
    %v1140 = vsel %vm587, %v1012, 0.0
    %v1141 = vsel %vm588, %v1012, 0.0
    %v1142 = vsel %vm589, %v1016, 0.0
    %v1143 = vsel %vm590, %v1016, 0.0
    %v1144 = vsel %vm591, %v1016, 0.0
    %v1145 = vsel %vm592, %v1016, 0.0
    %v1146 = vsel %vm593, %v1020, 0.0
    %v1147 = vsel %vm594, %v1020, 0.0
    %v1148 = vsel %vm595, %v1020, 0.0
    %v1149 = vsel %vm596, %v1020, 0.0
    %v1150 = vsel %vm597, %v1024, 0.0
    %v1151 = vsel %vm598, %v1024, 0.0
    %v1152 = vsel %vm599, %v1024, 0.0
    %v1153 = vsel %vm600, %v1024, 0.0
    %v1154 = vsel %vm601, %v1028, 0.0
    %v1155 = vsel %vm602, %v1028, 0.0
    %v1156 = vsel %vm603, %v1028, 0.0
    %v1157 = vsel %vm604, %v1028, 0.0
    %v1158 = vsel %vm605, %v1032, 0.0
    %v1159 = vsel %vm606, %v1032, 0.0
    %v1160 = vsel %vm607, %v1032, 0.0
    %v1161 = vsel %vm608, %v1032, 0.0
    %v1162 = vsel %vm609, %v1036, 0.0
    %v1163 = vsel %vm610, %v1036, 0.0
    %v1164 = vsel %vm611, %v1036, 0.0
    %v1165 = vsel %vm612, %v1036, 0.0
    %v1166 = vsel %vm613, %v1040, 0.0
    %v1167 = vsel %vm614, %v1040, 0.0
    %v1168 = vsel %vm615, %v1040, 0.0
    %v1169 = vsel %vm616, %v1040, 0.0
    %v1170 = vsel %vm617, %v1044, 0.0
    %v1171 = vsel %vm618, %v1044, 0.0
    %v1172 = vsel %vm619, %v1044, 0.0
    %v1173 = vsel %vm620, %v1044, 0.0
    %v1174 = vsel %vm621, %v1048, 0.0
    %v1175 = vsel %vm622, %v1048, 0.0
    %v1176 = vsel %vm623, %v1048, 0.0
    %v1177 = vsel %vm624, %v1048, 0.0
    %v1178 = vsel %vm625, %v1052, 0.0
    %v1179 = vsel %vm626, %v1052, 0.0
    %v1180 = vsel %vm627, %v1052, 0.0
    %v1181 = vsel %vm628, %v1052, 0.0
    %v1182 = vsel %vm629, %v1056, 0.0
    %v1183 = vsel %vm630, %v1056, 0.0
    %v1184 = vsel %vm631, %v1056, 0.0
    %v1185 = vsel %vm632, %v1056, 0.0
    %v1186 = vsel %vm633, %v1060, 0.0
    %v1187 = vsel %vm634, %v1060, 0.0
    %v1188 = vsel %vm635, %v1060, 0.0
    %v1189 = vsel %vm636, %v1060, 0.0
    %v1190 = vsel %vm637, %v1064, 0.0
    %v1191 = vsel %vm638, %v1064, 0.0
    %v1192 = vsel %vm639, %v1064, 0.0
    %v1193 = vsel %vm640, %v1064, 0.0
    %v1194 = vsel %vm641, %v1068, 0.0
    %v1195 = vsel %vm642, %v1068, 0.0
    %v1196 = vsel %vm643, %v1068, 0.0
    %v1197 = vsel %vm644, %v1068, 0.0
    %v1198 = vsel %vm645, %v1072, 0.0
    %v1199 = vsel %vm646, %v1072, 0.0
    %v1200 = vsel %vm647, %v1072, 0.0
    %v1201 = vsel %vm648, %v1072, 0.0
    %v1202 = vsel %vm649, %v1076, 0.0
    %v1203 = vsel %vm650, %v1076, 0.0
    %v1204 = vsel %vm651, %v1076, 0.0
    %v1205 = vsel %vm652, %v1076, 0.0
    %v1206 = vsel %vm653, %v1080, 0.0
    %v1207 = vsel %vm654, %v1080, 0.0
    %v1208 = vsel %vm655, %v1080, 0.0
    %v1209 = vsel %vm656, %v1080, 0.0
    %v1210 = vsel %vm657, %v1084, 0.0
    %v1211 = vsel %vm658, %v1084, 0.0
    %v1212 = vsel %vm659, %v1084, 0.0
    %v1213 = vsel %vm660, %v1084, 0.0
    %v1214 = vadd.f32 %v830, %v1086
    %v1215 = vadd.f32 %v831, %v1087
    %v1216 = vadd.f32 %v832, %v1088
    %v1217 = vadd.f32 %v833, %v1089
    %v1218 = vadd.f32 %v834, %v1090
    %v1219 = vadd.f32 %v835, %v1091
    %v1220 = vadd.f32 %v836, %v1092
    %v1221 = vadd.f32 %v837, %v1093
    %v1222 = vadd.f32 %v838, %v1094
    %v1223 = vadd.f32 %v839, %v1095
    %v1224 = vadd.f32 %v840, %v1096
    %v1225 = vadd.f32 %v841, %v1097
    %v1226 = vadd.f32 %v842, %v1098
    %v1227 = vadd.f32 %v843, %v1099
    %v1228 = vadd.f32 %v844, %v1100
    %v1229 = vadd.f32 %v845, %v1101
    %v1230 = vadd.f32 %v846, %v1102
    %v1231 = vadd.f32 %v847, %v1103
    %v1232 = vadd.f32 %v848, %v1104
    %v1233 = vadd.f32 %v849, %v1105
    %v1234 = vadd.f32 %v850, %v1106
    %v1235 = vadd.f32 %v851, %v1107
    %v1236 = vadd.f32 %v852, %v1108
    %v1237 = vadd.f32 %v853, %v1109
    %v1238 = vadd.f32 %v854, %v1110
    %v1239 = vadd.f32 %v855, %v1111
    %v1240 = vadd.f32 %v856, %v1112
    %v1241 = vadd.f32 %v857, %v1113
    %v1242 = vadd.f32 %v858, %v1114
    %v1243 = vadd.f32 %v859, %v1115
    %v1244 = vadd.f32 %v860, %v1116
    %v1245 = vadd.f32 %v861, %v1117
    %v1246 = vadd.f32 %v862, %v1118
    %v1247 = vadd.f32 %v863, %v1119
    %v1248 = vadd.f32 %v864, %v1120
    %v1249 = vadd.f32 %v865, %v1121
    %v1250 = vadd.f32 %v866, %v1122
    %v1251 = vadd.f32 %v867, %v1123
    %v1252 = vadd.f32 %v868, %v1124
    %v1253 = vadd.f32 %v869, %v1125
    %v1254 = vadd.f32 %v870, %v1126
    %v1255 = vadd.f32 %v871, %v1127
    %v1256 = vadd.f32 %v872, %v1128
    %v1257 = vadd.f32 %v873, %v1129
    %v1258 = vadd.f32 %v874, %v1130
    %v1259 = vadd.f32 %v875, %v1131
    %v1260 = vadd.f32 %v876, %v1132
    %v1261 = vadd.f32 %v877, %v1133
    %v1262 = vadd.f32 %v878, %v1134
    %v1263 = vadd.f32 %v879, %v1135
    %v1264 = vadd.f32 %v880, %v1136
    %v1265 = vadd.f32 %v881, %v1137
    %v1266 = vadd.f32 %v882, %v1138
    %v1267 = vadd.f32 %v883, %v1139
    %v1268 = vadd.f32 %v884, %v1140
    %v1269 = vadd.f32 %v885, %v1141
    %v1270 = vadd.f32 %v886, %v1142
    %v1271 = vadd.f32 %v887, %v1143
    %v1272 = vadd.f32 %v888, %v1144
    %v1273 = vadd.f32 %v889, %v1145
    %v1274 = vadd.f32 %v890, %v1146
    %v1275 = vadd.f32 %v891, %v1147
    %v1276 = vadd.f32 %v892, %v1148
    %v1277 = vadd.f32 %v893, %v1149
    %v1278 = vadd.f32 %v894, %v1150
    %v1279 = vadd.f32 %v895, %v1151
    %v1280 = vadd.f32 %v896, %v1152
    %v1281 = vadd.f32 %v897, %v1153
    %v1282 = vadd.f32 %v898, %v1154
    %v1283 = vadd.f32 %v899, %v1155
    %v1284 = vadd.f32 %v900, %v1156
    %v1285 = vadd.f32 %v901, %v1157
    %v1286 = vadd.f32 %v902, %v1158
    %v1287 = vadd.f32 %v903, %v1159
    %v1288 = vadd.f32 %v904, %v1160
    %v1289 = vadd.f32 %v905, %v1161
    %v1290 = vadd.f32 %v906, %v1162
    %v1291 = vadd.f32 %v907, %v1163
    %v1292 = vadd.f32 %v908, %v1164
    %v1293 = vadd.f32 %v909, %v1165
    %v1294 = vadd.f32 %v910, %v1166
    %v1295 = vadd.f32 %v911, %v1167
    %v1296 = vadd.f32 %v912, %v1168
    %v1297 = vadd.f32 %v913, %v1169
    %v1298 = vadd.f32 %v914, %v1170
    %v1299 = vadd.f32 %v915, %v1171
    %v1300 = vadd.f32 %v916, %v1172
    %v1301 = vadd.f32 %v917, %v1173
    %v1302 = vadd.f32 %v918, %v1174
    %v1303 = vadd.f32 %v919, %v1175
    %v1304 = vadd.f32 %v920, %v1176
    %v1305 = vadd.f32 %v921, %v1177
    %v1306 = vadd.f32 %v922, %v1178
    %v1307 = vadd.f32 %v923, %v1179
    %v1308 = vadd.f32 %v924, %v1180
    %v1309 = vadd.f32 %v925, %v1181
    %v1310 = vadd.f32 %v926, %v1182
    %v1311 = vadd.f32 %v927, %v1183
    %v1312 = vadd.f32 %v928, %v1184
    %v1313 = vadd.f32 %v929, %v1185
    %v1314 = vadd.f32 %v930, %v1186
    %v1315 = vadd.f32 %v931, %v1187
    %v1316 = vadd.f32 %v932, %v1188
    %v1317 = vadd.f32 %v933, %v1189
    %v1318 = vadd.f32 %v934, %v1190
    %v1319 = vadd.f32 %v935, %v1191
    %v1320 = vadd.f32 %v936, %v1192
    %v1321 = vadd.f32 %v937, %v1193
    %v1322 = vadd.f32 %v938, %v1194
    %v1323 = vadd.f32 %v939, %v1195
    %v1324 = vadd.f32 %v940, %v1196
    %v1325 = vadd.f32 %v941, %v1197
    %v1326 = vadd.f32 %v942, %v1198
    %v1327 = vadd.f32 %v943, %v1199
    %v1328 = vadd.f32 %v944, %v1200
    %v1329 = vadd.f32 %v945, %v1201
    %v1330 = vadd.f32 %v946, %v1202
    %v1331 = vadd.f32 %v947, %v1203
    %v1332 = vadd.f32 %v948, %v1204
    %v1333 = vadd.f32 %v949, %v1205
    %v1334 = vadd.f32 %v950, %v1206
    %v1335 = vadd.f32 %v951, %v1207
    %v1336 = vadd.f32 %v952, %v1208
    %v1337 = vadd.f32 %v953, %v1209
    %v1338 = vadd.f32 %v954, %v1210
    %v1339 = vadd.f32 %v955, %v1211
    %v1340 = vadd.f32 %v956, %v1212
    %v1341 = vadd.f32 %v957, %v1213
    %v1342 = vadd.f32 %v1214, %v1218
    %v1343 = vadd.f32 %v1342, %v1222
    %v1344 = vadd.f32 %v1343, %v1226
    %v1345 = vadd.f32 %v1344, %v1230
    %v1346 = vadd.f32 %v1345, %v1234
    %v1347 = vadd.f32 %v1346, %v1238
    %v1348 = vadd.f32 %v1347, %v1242
    %v1349 = vadd.f32 %v1348, %v1246
    %v1350 = vadd.f32 %v1349, %v1250
    %v1351 = vadd.f32 %v1350, %v1254
    %v1352 = vadd.f32 %v1351, %v1258
    %v1353 = vadd.f32 %v1352, %v1262
    %v1354 = vadd.f32 %v1353, %v1266
    %v1355 = vadd.f32 %v1354, %v1270
    %v1356 = vadd.f32 %v1355, %v1274
    %v1357 = vadd.f32 %v1356, %v1278
    %v1358 = vadd.f32 %v1357, %v1282
    %v1359 = vadd.f32 %v1358, %v1286
    %v1360 = vadd.f32 %v1359, %v1290
    %v1361 = vadd.f32 %v1360, %v1294
    %v1362 = vadd.f32 %v1361, %v1298
    %v1363 = vadd.f32 %v1362, %v1302
    %v1364 = vadd.f32 %v1363, %v1306
    %v1365 = vadd.f32 %v1364, %v1310
    %v1366 = vadd.f32 %v1365, %v1314
    %v1367 = vadd.f32 %v1366, %v1318
    %v1368 = vadd.f32 %v1367, %v1322
    %v1369 = vadd.f32 %v1368, %v1326
    %v1370 = vadd.f32 %v1369, %v1330
    %v1371 = vadd.f32 %v1370, %v1334
    %v1372 = vadd.f32 %v1371, %v1338
    %v1373 = vrot.slane %v1372, 4
    %v1374 = vadd.f32 %v1372, %v1373
    %v1375 = vrot.slane %v1374, 2
    %v1376 = vadd.f32 %v1374, %v1375
    %v1377 = vrot.slane %v1376, 1
    %v1378 = vadd.f32 %v1376, %v1377
    %v1379 = vadd.f32 %v1215, %v1219
    %v1380 = vadd.f32 %v1379, %v1223
    %v1381 = vadd.f32 %v1380, %v1227
    %v1382 = vadd.f32 %v1381, %v1231
    %v1383 = vadd.f32 %v1382, %v1235
    %v1384 = vadd.f32 %v1383, %v1239
    %v1385 = vadd.f32 %v1384, %v1243
    %v1386 = vadd.f32 %v1385, %v1247
    %v1387 = vadd.f32 %v1386, %v1251
    %v1388 = vadd.f32 %v1387, %v1255
    %v1389 = vadd.f32 %v1388, %v1259
    %v1390 = vadd.f32 %v1389, %v1263
    %v1391 = vadd.f32 %v1390, %v1267
    %v1392 = vadd.f32 %v1391, %v1271
    %v1393 = vadd.f32 %v1392, %v1275
    %v1394 = vadd.f32 %v1393, %v1279
    %v1395 = vadd.f32 %v1394, %v1283
    %v1396 = vadd.f32 %v1395, %v1287
    %v1397 = vadd.f32 %v1396, %v1291
    %v1398 = vadd.f32 %v1397, %v1295
    %v1399 = vadd.f32 %v1398, %v1299
    %v1400 = vadd.f32 %v1399, %v1303
    %v1401 = vadd.f32 %v1400, %v1307
    %v1402 = vadd.f32 %v1401, %v1311
    %v1403 = vadd.f32 %v1402, %v1315
    %v1404 = vadd.f32 %v1403, %v1319
    %v1405 = vadd.f32 %v1404, %v1323
    %v1406 = vadd.f32 %v1405, %v1327
    %v1407 = vadd.f32 %v1406, %v1331
    %v1408 = vadd.f32 %v1407, %v1335
    %v1409 = vadd.f32 %v1408, %v1339
    %v1410 = vrot.slane %v1409, 4
    %v1411 = vadd.f32 %v1409, %v1410
    %v1412 = vrot.slane %v1411, 2
    %v1413 = vadd.f32 %v1411, %v1412
    %v1414 = vrot.slane %v1413, 1
    %v1415 = vadd.f32 %v1413, %v1414
    %v1416 = vadd.f32 %v1216, %v1220
    %v1417 = vadd.f32 %v1416, %v1224
    %v1418 = vadd.f32 %v1417, %v1228
    %v1419 = vadd.f32 %v1418, %v1232
    %v1420 = vadd.f32 %v1419, %v1236
    %v1421 = vadd.f32 %v1420, %v1240
    %v1422 = vadd.f32 %v1421, %v1244
    %v1423 = vadd.f32 %v1422, %v1248
    %v1424 = vadd.f32 %v1423, %v1252
    %v1425 = vadd.f32 %v1424, %v1256
    %v1426 = vadd.f32 %v1425, %v1260
    %v1427 = vadd.f32 %v1426, %v1264
    %v1428 = vadd.f32 %v1427, %v1268
    %v1429 = vadd.f32 %v1428, %v1272
    %v1430 = vadd.f32 %v1429, %v1276
    %v1431 = vadd.f32 %v1430, %v1280
    %v1432 = vadd.f32 %v1431, %v1284
    %v1433 = vadd.f32 %v1432, %v1288
    %v1434 = vadd.f32 %v1433, %v1292
    %v1435 = vadd.f32 %v1434, %v1296
    %v1436 = vadd.f32 %v1435, %v1300
    %v1437 = vadd.f32 %v1436, %v1304
    %v1438 = vadd.f32 %v1437, %v1308
    %v1439 = vadd.f32 %v1438, %v1312
    %v1440 = vadd.f32 %v1439, %v1316
    %v1441 = vadd.f32 %v1440, %v1320
    %v1442 = vadd.f32 %v1441, %v1324
    %v1443 = vadd.f32 %v1442, %v1328
    %v1444 = vadd.f32 %v1443, %v1332
    %v1445 = vadd.f32 %v1444, %v1336
    %v1446 = vadd.f32 %v1445, %v1340
    %v1447 = vrot.slane %v1446, 4
    %v1448 = vadd.f32 %v1446, %v1447
    %v1449 = vrot.slane %v1448, 2
    %v1450 = vadd.f32 %v1448, %v1449
    %v1451 = vrot.slane %v1450, 1
    %v1452 = vadd.f32 %v1450, %v1451
    %v1453 = vadd.f32 %v1217, %v1221
    %v1454 = vadd.f32 %v1453, %v1225
    %v1455 = vadd.f32 %v1454, %v1229
    %v1456 = vadd.f32 %v1455, %v1233
    %v1457 = vadd.f32 %v1456, %v1237
    %v1458 = vadd.f32 %v1457, %v1241
    %v1459 = vadd.f32 %v1458, %v1245
    %v1460 = vadd.f32 %v1459, %v1249
    %v1461 = vadd.f32 %v1460, %v1253
    %v1462 = vadd.f32 %v1461, %v1257
    %v1463 = vadd.f32 %v1462, %v1261
    %v1464 = vadd.f32 %v1463, %v1265
    %v1465 = vadd.f32 %v1464, %v1269
    %v1466 = vadd.f32 %v1465, %v1273
    %v1467 = vadd.f32 %v1466, %v1277
    %v1468 = vadd.f32 %v1467, %v1281
    %v1469 = vadd.f32 %v1468, %v1285
    %v1470 = vadd.f32 %v1469, %v1289
    %v1471 = vadd.f32 %v1470, %v1293
    %v1472 = vadd.f32 %v1471, %v1297
    %v1473 = vadd.f32 %v1472, %v1301
    %v1474 = vadd.f32 %v1473, %v1305
    %v1475 = vadd.f32 %v1474, %v1309
    %v1476 = vadd.f32 %v1475, %v1313
    %v1477 = vadd.f32 %v1476, %v1317
    %v1478 = vadd.f32 %v1477, %v1321
    %v1479 = vadd.f32 %v1478, %v1325
    %v1480 = vadd.f32 %v1479, %v1329
    %v1481 = vadd.f32 %v1480, %v1333
    %v1482 = vadd.f32 %v1481, %v1337
    %v1483 = vadd.f32 %v1482, %v1341
    %v1484 = vrot.slane %v1483, 4
    %v1485 = vadd.f32 %v1483, %v1484
    %v1486 = vrot.slane %v1485, 2
    %v1487 = vadd.f32 %v1485, %v1486
    %v1488 = vrot.slane %v1487, 1
    %v1489 = vadd.f32 %v1487, %v1488
    %v1490 = vstv %s82
    %v1491 = vadd.f32 %v1378, %v1490
    %v1492 = vadd.f32 %v1415, %v1490
    %v1493 = vadd.f32 %v1452, %v1490
    %v1494 = vadd.f32 %v1489, %v1490
    %v1495 = vsel %vm666, 1, 0
    %v1496 = vsel %vm667, 1, 0
    %v1497 = vsel %vm668, 1, 0
    %v1498 = vsel %vm669, 1, 0
    %vm1499 = vcmp.eq.s32.totalorder %v1495, 1
    %vm1500 = vcmp.eq.s32.totalorder %v1496, 1
    %vm1501 = vcmp.eq.s32.totalorder %v1497, 1
    %vm1502 = vcmp.eq.s32.totalorder %v1498, 1
    %vm1503 = vmand %vm533, %vm1499
    %vm1504 = vmand %vm534, %vm1500
    %vm1505 = vmand %vm535, %vm1501
    %vm1506 = vmand %vm536, %vm1502
    %vm1507 = vmand %vm537, %vm1499
    %vm1508 = vmand %vm538, %vm1500
    %vm1509 = vmand %vm539, %vm1501
    %vm1510 = vmand %vm540, %vm1502
    %vm1511 = vmand %vm541, %vm1499
    %vm1512 = vmand %vm542, %vm1500
    %vm1513 = vmand %vm543, %vm1501
    %vm1514 = vmand %vm544, %vm1502
    %vm1515 = vmand %vm545, %vm1499
    %vm1516 = vmand %vm546, %vm1500
    %vm1517 = vmand %vm547, %vm1501
    %vm1518 = vmand %vm548, %vm1502
    %vm1519 = vmand %vm549, %vm1499
    %vm1520 = vmand %vm550, %vm1500
    %vm1521 = vmand %vm551, %vm1501
    %vm1522 = vmand %vm552, %vm1502
    %vm1523 = vmand %vm553, %vm1499
    %vm1524 = vmand %vm554, %vm1500
    %vm1525 = vmand %vm555, %vm1501
    %vm1526 = vmand %vm556, %vm1502
    %vm1527 = vmand %vm557, %vm1499
    %vm1528 = vmand %vm558, %vm1500
    %vm1529 = vmand %vm559, %vm1501
    %vm1530 = vmand %vm560, %vm1502
    %vm1531 = vmand %vm561, %vm1499
    %vm1532 = vmand %vm562, %vm1500
    %vm1533 = vmand %vm563, %vm1501
    %vm1534 = vmand %vm564, %vm1502
    %vm1535 = vmand %vm565, %vm1499
    %vm1536 = vmand %vm566, %vm1500
    %vm1537 = vmand %vm567, %vm1501
    %vm1538 = vmand %vm568, %vm1502
    %vm1539 = vmand %vm569, %vm1499
    %vm1540 = vmand %vm570, %vm1500
    %vm1541 = vmand %vm571, %vm1501
    %vm1542 = vmand %vm572, %vm1502
    %vm1543 = vmand %vm573, %vm1499
    %vm1544 = vmand %vm574, %vm1500
    %vm1545 = vmand %vm575, %vm1501
    %vm1546 = vmand %vm576, %vm1502
    %vm1547 = vmand %vm577, %vm1499
    %vm1548 = vmand %vm578, %vm1500
    %vm1549 = vmand %vm579, %vm1501
    %vm1550 = vmand %vm580, %vm1502
    %vm1551 = vmand %vm581, %vm1499
    %vm1552 = vmand %vm582, %vm1500
    %vm1553 = vmand %vm583, %vm1501
    %vm1554 = vmand %vm584, %vm1502
    %vm1555 = vmand %vm585, %vm1499
    %vm1556 = vmand %vm586, %vm1500
    %vm1557 = vmand %vm587, %vm1501
    %vm1558 = vmand %vm588, %vm1502
    %vm1559 = vmand %vm589, %vm1499
    %vm1560 = vmand %vm590, %vm1500
    %vm1561 = vmand %vm591, %vm1501
    %vm1562 = vmand %vm592, %vm1502
    %vm1563 = vmand %vm593, %vm1499
    %vm1564 = vmand %vm594, %vm1500
    %vm1565 = vmand %vm595, %vm1501
    %vm1566 = vmand %vm596, %vm1502
    %vm1567 = vmand %vm597, %vm1499
    %vm1568 = vmand %vm598, %vm1500
    %vm1569 = vmand %vm599, %vm1501
    %vm1570 = vmand %vm600, %vm1502
    %vm1571 = vmand %vm601, %vm1499
    %vm1572 = vmand %vm602, %vm1500
    %vm1573 = vmand %vm603, %vm1501
    %vm1574 = vmand %vm604, %vm1502
    %vm1575 = vmand %vm605, %vm1499
    %vm1576 = vmand %vm606, %vm1500
    %vm1577 = vmand %vm607, %vm1501
    %vm1578 = vmand %vm608, %vm1502
    %vm1579 = vmand %vm609, %vm1499
    %vm1580 = vmand %vm610, %vm1500
    %vm1581 = vmand %vm611, %vm1501
    %vm1582 = vmand %vm612, %vm1502
    %vm1583 = vmand %vm613, %vm1499
    %vm1584 = vmand %vm614, %vm1500
    %vm1585 = vmand %vm615, %vm1501
    %vm1586 = vmand %vm616, %vm1502
    %vm1587 = vmand %vm617, %vm1499
    %vm1588 = vmand %vm618, %vm1500
    %vm1589 = vmand %vm619, %vm1501
    %vm1590 = vmand %vm620, %vm1502
    %vm1591 = vmand %vm621, %vm1499
    %vm1592 = vmand %vm622, %vm1500
    %vm1593 = vmand %vm623, %vm1501
    %vm1594 = vmand %vm624, %vm1502
    %vm1595 = vmand %vm625, %vm1499
    %vm1596 = vmand %vm626, %vm1500
    %vm1597 = vmand %vm627, %vm1501
    %vm1598 = vmand %vm628, %vm1502
    %vm1599 = vmand %vm629, %vm1499
    %vm1600 = vmand %vm630, %vm1500
    %vm1601 = vmand %vm631, %vm1501
    %vm1602 = vmand %vm632, %vm1502
    %vm1603 = vmand %vm633, %vm1499
    %vm1604 = vmand %vm634, %vm1500
    %vm1605 = vmand %vm635, %vm1501
    %vm1606 = vmand %vm636, %vm1502
    %vm1607 = vmand %vm637, %vm1499
    %vm1608 = vmand %vm638, %vm1500
    %vm1609 = vmand %vm639, %vm1501
    %vm1610 = vmand %vm640, %vm1502
    %vm1611 = vmand %vm641, %vm1499
    %vm1612 = vmand %vm642, %vm1500
    %vm1613 = vmand %vm643, %vm1501
    %vm1614 = vmand %vm644, %vm1502
    %vm1615 = vmand %vm645, %vm1499
    %vm1616 = vmand %vm646, %vm1500
    %vm1617 = vmand %vm647, %vm1501
    %vm1618 = vmand %vm648, %vm1502
    %vm1619 = vmand %vm649, %vm1499
    %vm1620 = vmand %vm650, %vm1500
    %vm1621 = vmand %vm651, %vm1501
    %vm1622 = vmand %vm652, %vm1502
    %vm1623 = vmand %vm653, %vm1499
    %vm1624 = vmand %vm654, %vm1500
    %vm1625 = vmand %vm655, %vm1501
    %vm1626 = vmand %vm656, %vm1502
    %vm1627 = vmand %vm657, %vm1499
    %vm1628 = vmand %vm658, %vm1500
    %vm1629 = vmand %vm659, %vm1501
    %vm1630 = vmand %vm660, %vm1502
    %v1631 = vsel %vm1503, %v1491, -1e+30
    %v1632 = vsel %vm1504, %v1492, -1e+30
    %v1633 = vsel %vm1505, %v1493, -1e+30
    %v1634 = vsel %vm1506, %v1494, -1e+30
    %v1635 = vsel %vm1507, %v1491, -1e+30
    %v1636 = vsel %vm1508, %v1492, -1e+30
    %v1637 = vsel %vm1509, %v1493, -1e+30
    %v1638 = vsel %vm1510, %v1494, -1e+30
    %v1639 = vsel %vm1511, %v1491, -1e+30
    %v1640 = vsel %vm1512, %v1492, -1e+30
    %v1641 = vsel %vm1513, %v1493, -1e+30
    %v1642 = vsel %vm1514, %v1494, -1e+30
    %v1643 = vsel %vm1515, %v1491, -1e+30
    %v1644 = vsel %vm1516, %v1492, -1e+30
    %v1645 = vsel %vm1517, %v1493, -1e+30
    %v1646 = vsel %vm1518, %v1494, -1e+30
    %v1647 = vsel %vm1519, %v1491, -1e+30
    %v1648 = vsel %vm1520, %v1492, -1e+30
    %v1649 = vsel %vm1521, %v1493, -1e+30
    %v1650 = vsel %vm1522, %v1494, -1e+30
    %v1651 = vsel %vm1523, %v1491, -1e+30
    %v1652 = vsel %vm1524, %v1492, -1e+30
    %v1653 = vsel %vm1525, %v1493, -1e+30
    %v1654 = vsel %vm1526, %v1494, -1e+30
    %v1655 = vsel %vm1527, %v1491, -1e+30
    %v1656 = vsel %vm1528, %v1492, -1e+30
    %v1657 = vsel %vm1529, %v1493, -1e+30
    %v1658 = vsel %vm1530, %v1494, -1e+30
    %v1659 = vsel %vm1531, %v1491, -1e+30
    %v1660 = vsel %vm1532, %v1492, -1e+30
    %v1661 = vsel %vm1533, %v1493, -1e+30
    %v1662 = vsel %vm1534, %v1494, -1e+30
    %v1663 = vsel %vm1535, %v1491, -1e+30
    %v1664 = vsel %vm1536, %v1492, -1e+30
    %v1665 = vsel %vm1537, %v1493, -1e+30
    %v1666 = vsel %vm1538, %v1494, -1e+30
    %v1667 = vsel %vm1539, %v1491, -1e+30
    %v1668 = vsel %vm1540, %v1492, -1e+30
    %v1669 = vsel %vm1541, %v1493, -1e+30
    %v1670 = vsel %vm1542, %v1494, -1e+30
    %v1671 = vsel %vm1543, %v1491, -1e+30
    %v1672 = vsel %vm1544, %v1492, -1e+30
    %v1673 = vsel %vm1545, %v1493, -1e+30
    %v1674 = vsel %vm1546, %v1494, -1e+30
    %v1675 = vsel %vm1547, %v1491, -1e+30
    %v1676 = vsel %vm1548, %v1492, -1e+30
    %v1677 = vsel %vm1549, %v1493, -1e+30
    %v1678 = vsel %vm1550, %v1494, -1e+30
    %v1679 = vsel %vm1551, %v1491, -1e+30
    %v1680 = vsel %vm1552, %v1492, -1e+30
    %v1681 = vsel %vm1553, %v1493, -1e+30
    %v1682 = vsel %vm1554, %v1494, -1e+30
    %v1683 = vsel %vm1555, %v1491, -1e+30
    %v1684 = vsel %vm1556, %v1492, -1e+30
    %v1685 = vsel %vm1557, %v1493, -1e+30
    %v1686 = vsel %vm1558, %v1494, -1e+30
    %v1687 = vsel %vm1559, %v1491, -1e+30
    %v1688 = vsel %vm1560, %v1492, -1e+30
    %v1689 = vsel %vm1561, %v1493, -1e+30
    %v1690 = vsel %vm1562, %v1494, -1e+30
    %v1691 = vsel %vm1563, %v1491, -1e+30
    %v1692 = vsel %vm1564, %v1492, -1e+30
    %v1693 = vsel %vm1565, %v1493, -1e+30
    %v1694 = vsel %vm1566, %v1494, -1e+30
    %v1695 = vsel %vm1567, %v1491, -1e+30
    %v1696 = vsel %vm1568, %v1492, -1e+30
    %v1697 = vsel %vm1569, %v1493, -1e+30
    %v1698 = vsel %vm1570, %v1494, -1e+30
    %v1699 = vsel %vm1571, %v1491, -1e+30
    %v1700 = vsel %vm1572, %v1492, -1e+30
    %v1701 = vsel %vm1573, %v1493, -1e+30
    %v1702 = vsel %vm1574, %v1494, -1e+30
    %v1703 = vsel %vm1575, %v1491, -1e+30
    %v1704 = vsel %vm1576, %v1492, -1e+30
    %v1705 = vsel %vm1577, %v1493, -1e+30
    %v1706 = vsel %vm1578, %v1494, -1e+30
    %v1707 = vsel %vm1579, %v1491, -1e+30
    %v1708 = vsel %vm1580, %v1492, -1e+30
    %v1709 = vsel %vm1581, %v1493, -1e+30
    %v1710 = vsel %vm1582, %v1494, -1e+30
    %v1711 = vsel %vm1583, %v1491, -1e+30
    %v1712 = vsel %vm1584, %v1492, -1e+30
    %v1713 = vsel %vm1585, %v1493, -1e+30
    %v1714 = vsel %vm1586, %v1494, -1e+30
    %v1715 = vsel %vm1587, %v1491, -1e+30
    %v1716 = vsel %vm1588, %v1492, -1e+30
    %v1717 = vsel %vm1589, %v1493, -1e+30
    %v1718 = vsel %vm1590, %v1494, -1e+30
    %v1719 = vsel %vm1591, %v1491, -1e+30
    %v1720 = vsel %vm1592, %v1492, -1e+30
    %v1721 = vsel %vm1593, %v1493, -1e+30
    %v1722 = vsel %vm1594, %v1494, -1e+30
    %v1723 = vsel %vm1595, %v1491, -1e+30
    %v1724 = vsel %vm1596, %v1492, -1e+30
    %v1725 = vsel %vm1597, %v1493, -1e+30
    %v1726 = vsel %vm1598, %v1494, -1e+30
    %v1727 = vsel %vm1599, %v1491, -1e+30
    %v1728 = vsel %vm1600, %v1492, -1e+30
    %v1729 = vsel %vm1601, %v1493, -1e+30
    %v1730 = vsel %vm1602, %v1494, -1e+30
    %v1731 = vsel %vm1603, %v1491, -1e+30
    %v1732 = vsel %vm1604, %v1492, -1e+30
    %v1733 = vsel %vm1605, %v1493, -1e+30
    %v1734 = vsel %vm1606, %v1494, -1e+30
    %v1735 = vsel %vm1607, %v1491, -1e+30
    %v1736 = vsel %vm1608, %v1492, -1e+30
    %v1737 = vsel %vm1609, %v1493, -1e+30
    %v1738 = vsel %vm1610, %v1494, -1e+30
    %v1739 = vsel %vm1611, %v1491, -1e+30
    %v1740 = vsel %vm1612, %v1492, -1e+30
    %v1741 = vsel %vm1613, %v1493, -1e+30
    %v1742 = vsel %vm1614, %v1494, -1e+30
    %v1743 = vsel %vm1615, %v1491, -1e+30
    %v1744 = vsel %vm1616, %v1492, -1e+30
    %v1745 = vsel %vm1617, %v1493, -1e+30
    %v1746 = vsel %vm1618, %v1494, -1e+30
    %v1747 = vsel %vm1619, %v1491, -1e+30
    %v1748 = vsel %vm1620, %v1492, -1e+30
    %v1749 = vsel %vm1621, %v1493, -1e+30
    %v1750 = vsel %vm1622, %v1494, -1e+30
    %v1751 = vsel %vm1623, %v1491, -1e+30
    %v1752 = vsel %vm1624, %v1492, -1e+30
    %v1753 = vsel %vm1625, %v1493, -1e+30
    %v1754 = vsel %vm1626, %v1494, -1e+30
    %v1755 = vsel %vm1627, %v1491, -1e+30
    %v1756 = vsel %vm1628, %v1492, -1e+30
    %v1757 = vsel %vm1629, %v1493, -1e+30
    %v1758 = vsel %vm1630, %v1494, -1e+30
    %v1759 = vmax.f32 %v1631, %v1632
    %v1760 = vmax.f32 %v1759, %v1633
    %v1761 = vmax.f32 %v1760, %v1634
    %1762 = vmax.xlane.f32.xlu0 %v1761
    %v1763 = vpop.xlane.xlu0 %1762
    %v1764 = vmax.f32 %v1635, %v1636
    %v1765 = vmax.f32 %v1764, %v1637
    %v1766 = vmax.f32 %v1765, %v1638
    %1767 = vmax.xlane.f32.xlu0 %v1766
    %v1768 = vpop.xlane.xlu0 %1767
    %v1769 = vmax.f32 %v1639, %v1640
    %v1770 = vmax.f32 %v1769, %v1641
    %v1771 = vmax.f32 %v1770, %v1642
    %1772 = vmax.xlane.f32.xlu0 %v1771
    %v1773 = vpop.xlane.xlu0 %1772
    %v1774 = vmax.f32 %v1643, %v1644
    %v1775 = vmax.f32 %v1774, %v1645
    %v1776 = vmax.f32 %v1775, %v1646
    %1777 = vmax.xlane.f32.xlu0 %v1776
    %v1778 = vpop.xlane.xlu0 %1777
    %v1779 = vmax.f32 %v1647, %v1648
    %v1780 = vmax.f32 %v1779, %v1649
    %v1781 = vmax.f32 %v1780, %v1650
    %1782 = vmax.xlane.f32.xlu0 %v1781
    %v1783 = vpop.xlane.xlu0 %1782
    %v1784 = vmax.f32 %v1651, %v1652
    %v1785 = vmax.f32 %v1784, %v1653
    %v1786 = vmax.f32 %v1785, %v1654
    %1787 = vmax.xlane.f32.xlu0 %v1786
    %v1788 = vpop.xlane.xlu0 %1787
    %v1789 = vmax.f32 %v1655, %v1656
    %v1790 = vmax.f32 %v1789, %v1657
    %v1791 = vmax.f32 %v1790, %v1658
    %1792 = vmax.xlane.f32.xlu0 %v1791
    %v1793 = vpop.xlane.xlu0 %1792
    %v1794 = vmax.f32 %v1659, %v1660
    %v1795 = vmax.f32 %v1794, %v1661
    %v1796 = vmax.f32 %v1795, %v1662
    %1797 = vmax.xlane.f32.xlu0 %v1796
    %v1798 = vpop.xlane.xlu0 %1797
    %v1799 = vmax.f32 %v1663, %v1664
    %v1800 = vmax.f32 %v1799, %v1665
    %v1801 = vmax.f32 %v1800, %v1666
    %1802 = vmax.xlane.f32.xlu0 %v1801
    %v1803 = vpop.xlane.xlu0 %1802
    %v1804 = vmax.f32 %v1667, %v1668
    %v1805 = vmax.f32 %v1804, %v1669
    %v1806 = vmax.f32 %v1805, %v1670
    %1807 = vmax.xlane.f32.xlu0 %v1806
    %v1808 = vpop.xlane.xlu0 %1807
    %v1809 = vmax.f32 %v1671, %v1672
    %v1810 = vmax.f32 %v1809, %v1673
    %v1811 = vmax.f32 %v1810, %v1674
    %1812 = vmax.xlane.f32.xlu0 %v1811
    %v1813 = vpop.xlane.xlu0 %1812
    %v1814 = vmax.f32 %v1675, %v1676
    %v1815 = vmax.f32 %v1814, %v1677
    %v1816 = vmax.f32 %v1815, %v1678
    %1817 = vmax.xlane.f32.xlu0 %v1816
    %v1818 = vpop.xlane.xlu0 %1817
    %v1819 = vmax.f32 %v1679, %v1680
    %v1820 = vmax.f32 %v1819, %v1681
    %v1821 = vmax.f32 %v1820, %v1682
    %1822 = vmax.xlane.f32.xlu0 %v1821
    %v1823 = vpop.xlane.xlu0 %1822
    %v1824 = vmax.f32 %v1683, %v1684
    %v1825 = vmax.f32 %v1824, %v1685
    %v1826 = vmax.f32 %v1825, %v1686
    %1827 = vmax.xlane.f32.xlu0 %v1826
    %v1828 = vpop.xlane.xlu0 %1827
    %v1829 = vmax.f32 %v1687, %v1688
    %v1830 = vmax.f32 %v1829, %v1689
    %v1831 = vmax.f32 %v1830, %v1690
    %1832 = vmax.xlane.f32.xlu0 %v1831
    %v1833 = vpop.xlane.xlu0 %1832
    %v1834 = vmax.f32 %v1691, %v1692
    %v1835 = vmax.f32 %v1834, %v1693
    %v1836 = vmax.f32 %v1835, %v1694
    %1837 = vmax.xlane.f32.xlu0 %v1836
    %v1838 = vpop.xlane.xlu0 %1837
    %v1839 = vmax.f32 %v1695, %v1696
    %v1840 = vmax.f32 %v1839, %v1697
    %v1841 = vmax.f32 %v1840, %v1698
    %1842 = vmax.xlane.f32.xlu0 %v1841
    %v1843 = vpop.xlane.xlu0 %1842
    %v1844 = vmax.f32 %v1699, %v1700
    %v1845 = vmax.f32 %v1844, %v1701
    %v1846 = vmax.f32 %v1845, %v1702
    %1847 = vmax.xlane.f32.xlu0 %v1846
    %v1848 = vpop.xlane.xlu0 %1847
    %v1849 = vmax.f32 %v1703, %v1704
    %v1850 = vmax.f32 %v1849, %v1705
    %v1851 = vmax.f32 %v1850, %v1706
    %1852 = vmax.xlane.f32.xlu0 %v1851
    %v1853 = vpop.xlane.xlu0 %1852
    %v1854 = vmax.f32 %v1707, %v1708
    %v1855 = vmax.f32 %v1854, %v1709
    %v1856 = vmax.f32 %v1855, %v1710
    %1857 = vmax.xlane.f32.xlu0 %v1856
    %v1858 = vpop.xlane.xlu0 %1857
    %v1859 = vmax.f32 %v1711, %v1712
    %v1860 = vmax.f32 %v1859, %v1713
    %v1861 = vmax.f32 %v1860, %v1714
    %1862 = vmax.xlane.f32.xlu0 %v1861
    %v1863 = vpop.xlane.xlu0 %1862
    %v1864 = vmax.f32 %v1715, %v1716
    %v1865 = vmax.f32 %v1864, %v1717
    %v1866 = vmax.f32 %v1865, %v1718
    %1867 = vmax.xlane.f32.xlu0 %v1866
    %v1868 = vpop.xlane.xlu0 %1867
    %v1869 = vmax.f32 %v1719, %v1720
    %v1870 = vmax.f32 %v1869, %v1721
    %v1871 = vmax.f32 %v1870, %v1722
    %1872 = vmax.xlane.f32.xlu0 %v1871
    %v1873 = vpop.xlane.xlu0 %1872
    %v1874 = vmax.f32 %v1723, %v1724
    %v1875 = vmax.f32 %v1874, %v1725
    %v1876 = vmax.f32 %v1875, %v1726
    %1877 = vmax.xlane.f32.xlu0 %v1876
    %v1878 = vpop.xlane.xlu0 %1877
    %v1879 = vmax.f32 %v1727, %v1728
    %v1880 = vmax.f32 %v1879, %v1729
    %v1881 = vmax.f32 %v1880, %v1730
    %1882 = vmax.xlane.f32.xlu0 %v1881
    %v1883 = vpop.xlane.xlu0 %1882
    %v1884 = vmax.f32 %v1731, %v1732
    %v1885 = vmax.f32 %v1884, %v1733
    %v1886 = vmax.f32 %v1885, %v1734
    %1887 = vmax.xlane.f32.xlu0 %v1886
    %v1888 = vpop.xlane.xlu0 %1887
    %v1889 = vmax.f32 %v1735, %v1736
    %v1890 = vmax.f32 %v1889, %v1737
    %v1891 = vmax.f32 %v1890, %v1738
    %1892 = vmax.xlane.f32.xlu0 %v1891
    %v1893 = vpop.xlane.xlu0 %1892
    %v1894 = vmax.f32 %v1739, %v1740
    %v1895 = vmax.f32 %v1894, %v1741
    %v1896 = vmax.f32 %v1895, %v1742
    %1897 = vmax.xlane.f32.xlu0 %v1896
    %v1898 = vpop.xlane.xlu0 %1897
    %v1899 = vmax.f32 %v1743, %v1744
    %v1900 = vmax.f32 %v1899, %v1745
    %v1901 = vmax.f32 %v1900, %v1746
    %1902 = vmax.xlane.f32.xlu0 %v1901
    %v1903 = vpop.xlane.xlu0 %1902
    %v1904 = vmax.f32 %v1747, %v1748
    %v1905 = vmax.f32 %v1904, %v1749
    %v1906 = vmax.f32 %v1905, %v1750
    %1907 = vmax.xlane.f32.xlu0 %v1906
    %v1908 = vpop.xlane.xlu0 %1907
    %v1909 = vmax.f32 %v1751, %v1752
    %v1910 = vmax.f32 %v1909, %v1753
    %v1911 = vmax.f32 %v1910, %v1754
    %1912 = vmax.xlane.f32.xlu0 %v1911
    %v1913 = vpop.xlane.xlu0 %1912
    %v1914 = vmax.f32 %v1755, %v1756
    %v1915 = vmax.f32 %v1914, %v1757
    %v1916 = vmax.f32 %v1915, %v1758
    %1917 = vmax.xlane.f32.xlu0 %v1916
    %v1918 = vpop.xlane.xlu0 %1917
    %v1919 = vsel %vm533, %v1763, 0.0
    %v1920 = vsel %vm534, %v1763, 0.0
    %v1921 = vsel %vm535, %v1763, 0.0
    %v1922 = vsel %vm536, %v1763, 0.0
    %v1923 = vsel %vm537, %v1768, 0.0
    %v1924 = vsel %vm538, %v1768, 0.0
    %v1925 = vsel %vm539, %v1768, 0.0
    %v1926 = vsel %vm540, %v1768, 0.0
    %v1927 = vsel %vm541, %v1773, 0.0
    %v1928 = vsel %vm542, %v1773, 0.0
    %v1929 = vsel %vm543, %v1773, 0.0
    %v1930 = vsel %vm544, %v1773, 0.0
    %v1931 = vsel %vm545, %v1778, 0.0
    %v1932 = vsel %vm546, %v1778, 0.0
    %v1933 = vsel %vm547, %v1778, 0.0
    %v1934 = vsel %vm548, %v1778, 0.0
    %v1935 = vsel %vm549, %v1783, 0.0
    %v1936 = vsel %vm550, %v1783, 0.0
    %v1937 = vsel %vm551, %v1783, 0.0
    %v1938 = vsel %vm552, %v1783, 0.0
    %v1939 = vsel %vm553, %v1788, 0.0
    %v1940 = vsel %vm554, %v1788, 0.0
    %v1941 = vsel %vm555, %v1788, 0.0
    %v1942 = vsel %vm556, %v1788, 0.0
    %v1943 = vsel %vm557, %v1793, 0.0
    %v1944 = vsel %vm558, %v1793, 0.0
    %v1945 = vsel %vm559, %v1793, 0.0
    %v1946 = vsel %vm560, %v1793, 0.0
    %v1947 = vsel %vm561, %v1798, 0.0
    %v1948 = vsel %vm562, %v1798, 0.0
    %v1949 = vsel %vm563, %v1798, 0.0
    %v1950 = vsel %vm564, %v1798, 0.0
    %v1951 = vsel %vm565, %v1803, 0.0
    %v1952 = vsel %vm566, %v1803, 0.0
    %v1953 = vsel %vm567, %v1803, 0.0
    %v1954 = vsel %vm568, %v1803, 0.0
    %v1955 = vsel %vm569, %v1808, 0.0
    %v1956 = vsel %vm570, %v1808, 0.0
    %v1957 = vsel %vm571, %v1808, 0.0
    %v1958 = vsel %vm572, %v1808, 0.0
    %v1959 = vsel %vm573, %v1813, 0.0
    %v1960 = vsel %vm574, %v1813, 0.0
    %v1961 = vsel %vm575, %v1813, 0.0
    %v1962 = vsel %vm576, %v1813, 0.0
    %v1963 = vsel %vm577, %v1818, 0.0
    %v1964 = vsel %vm578, %v1818, 0.0
    %v1965 = vsel %vm579, %v1818, 0.0
    %v1966 = vsel %vm580, %v1818, 0.0
    %v1967 = vsel %vm581, %v1823, 0.0
    %v1968 = vsel %vm582, %v1823, 0.0
    %v1969 = vsel %vm583, %v1823, 0.0
    %v1970 = vsel %vm584, %v1823, 0.0
    %v1971 = vsel %vm585, %v1828, 0.0
    %v1972 = vsel %vm586, %v1828, 0.0
    %v1973 = vsel %vm587, %v1828, 0.0
    %v1974 = vsel %vm588, %v1828, 0.0
    %v1975 = vsel %vm589, %v1833, 0.0
    %v1976 = vsel %vm590, %v1833, 0.0
    %v1977 = vsel %vm591, %v1833, 0.0
    %v1978 = vsel %vm592, %v1833, 0.0
    %v1979 = vsel %vm593, %v1838, 0.0
    %v1980 = vsel %vm594, %v1838, 0.0
    %v1981 = vsel %vm595, %v1838, 0.0
    %v1982 = vsel %vm596, %v1838, 0.0
    %v1983 = vsel %vm597, %v1843, 0.0
    %v1984 = vsel %vm598, %v1843, 0.0
    %v1985 = vsel %vm599, %v1843, 0.0
    %v1986 = vsel %vm600, %v1843, 0.0
    %v1987 = vsel %vm601, %v1848, 0.0
    %v1988 = vsel %vm602, %v1848, 0.0
    %v1989 = vsel %vm603, %v1848, 0.0
    %v1990 = vsel %vm604, %v1848, 0.0
    %v1991 = vsel %vm605, %v1853, 0.0
    %v1992 = vsel %vm606, %v1853, 0.0
    %v1993 = vsel %vm607, %v1853, 0.0
    %v1994 = vsel %vm608, %v1853, 0.0
    %v1995 = vsel %vm609, %v1858, 0.0
    %v1996 = vsel %vm610, %v1858, 0.0
    %v1997 = vsel %vm611, %v1858, 0.0
    %v1998 = vsel %vm612, %v1858, 0.0
    %v1999 = vsel %vm613, %v1863, 0.0
    %v2000 = vsel %vm614, %v1863, 0.0
    %v2001 = vsel %vm615, %v1863, 0.0
    %v2002 = vsel %vm616, %v1863, 0.0
    %v2003 = vsel %vm617, %v1868, 0.0
    %v2004 = vsel %vm618, %v1868, 0.0
    %v2005 = vsel %vm619, %v1868, 0.0
    %v2006 = vsel %vm620, %v1868, 0.0
    %v2007 = vsel %vm621, %v1873, 0.0
    %v2008 = vsel %vm622, %v1873, 0.0
    %v2009 = vsel %vm623, %v1873, 0.0
    %v2010 = vsel %vm624, %v1873, 0.0
    %v2011 = vsel %vm625, %v1878, 0.0
    %v2012 = vsel %vm626, %v1878, 0.0
    %v2013 = vsel %vm627, %v1878, 0.0
    %v2014 = vsel %vm628, %v1878, 0.0
    %v2015 = vsel %vm629, %v1883, 0.0
    %v2016 = vsel %vm630, %v1883, 0.0
    %v2017 = vsel %vm631, %v1883, 0.0
    %v2018 = vsel %vm632, %v1883, 0.0
    %v2019 = vsel %vm633, %v1888, 0.0
    %v2020 = vsel %vm634, %v1888, 0.0
    %v2021 = vsel %vm635, %v1888, 0.0
    %v2022 = vsel %vm636, %v1888, 0.0
    %v2023 = vsel %vm637, %v1893, 0.0
    %v2024 = vsel %vm638, %v1893, 0.0
    %v2025 = vsel %vm639, %v1893, 0.0
    %v2026 = vsel %vm640, %v1893, 0.0
    %v2027 = vsel %vm641, %v1898, 0.0
    %v2028 = vsel %vm642, %v1898, 0.0
    %v2029 = vsel %vm643, %v1898, 0.0
    %v2030 = vsel %vm644, %v1898, 0.0
    %v2031 = vsel %vm645, %v1903, 0.0
    %v2032 = vsel %vm646, %v1903, 0.0
    %v2033 = vsel %vm647, %v1903, 0.0
    %v2034 = vsel %vm648, %v1903, 0.0
    %v2035 = vsel %vm649, %v1908, 0.0
    %v2036 = vsel %vm650, %v1908, 0.0
    %v2037 = vsel %vm651, %v1908, 0.0
    %v2038 = vsel %vm652, %v1908, 0.0
    %v2039 = vsel %vm653, %v1913, 0.0
    %v2040 = vsel %vm654, %v1913, 0.0
    %v2041 = vsel %vm655, %v1913, 0.0
    %v2042 = vsel %vm656, %v1913, 0.0
    %v2043 = vsel %vm657, %v1918, 0.0
    %v2044 = vsel %vm658, %v1918, 0.0
    %v2045 = vsel %vm659, %v1918, 0.0
    %v2046 = vsel %vm660, %v1918, 0.0
    %v2047 = vadd.f32 %v1919, %v1923
    %v2048 = vadd.f32 %v2047, %v1927
    %v2049 = vadd.f32 %v2048, %v1931
    %v2050 = vadd.f32 %v2049, %v1935
    %v2051 = vadd.f32 %v2050, %v1939
    %v2052 = vadd.f32 %v2051, %v1943
    %v2053 = vadd.f32 %v2052, %v1947
    %v2054 = vadd.f32 %v2053, %v1951
    %v2055 = vadd.f32 %v2054, %v1955
    %v2056 = vadd.f32 %v2055, %v1959
    %v2057 = vadd.f32 %v2056, %v1963
    %v2058 = vadd.f32 %v2057, %v1967
    %v2059 = vadd.f32 %v2058, %v1971
    %v2060 = vadd.f32 %v2059, %v1975
    %v2061 = vadd.f32 %v2060, %v1979
    %v2062 = vadd.f32 %v2061, %v1983
    %v2063 = vadd.f32 %v2062, %v1987
    %v2064 = vadd.f32 %v2063, %v1991
    %v2065 = vadd.f32 %v2064, %v1995
    %v2066 = vadd.f32 %v2065, %v1999
    %v2067 = vadd.f32 %v2066, %v2003
    %v2068 = vadd.f32 %v2067, %v2007
    %v2069 = vadd.f32 %v2068, %v2011
    %v2070 = vadd.f32 %v2069, %v2015
    %v2071 = vadd.f32 %v2070, %v2019
    %v2072 = vadd.f32 %v2071, %v2023
    %v2073 = vadd.f32 %v2072, %v2027
    %v2074 = vadd.f32 %v2073, %v2031
    %v2075 = vadd.f32 %v2074, %v2035
    %v2076 = vadd.f32 %v2075, %v2039
    %v2077 = vadd.f32 %v2076, %v2043
    %v2078 = vrot.slane %v2077, 4
    %v2079 = vadd.f32 %v2077, %v2078
    %v2080 = vrot.slane %v2079, 2
    %v2081 = vadd.f32 %v2079, %v2080
    %v2082 = vrot.slane %v2081, 1
    %v2083 = vadd.f32 %v2081, %v2082
    %v2084 = vadd.f32 %v1920, %v1924
    %v2085 = vadd.f32 %v2084, %v1928
    %v2086 = vadd.f32 %v2085, %v1932
    %v2087 = vadd.f32 %v2086, %v1936
    %v2088 = vadd.f32 %v2087, %v1940
    %v2089 = vadd.f32 %v2088, %v1944
    %v2090 = vadd.f32 %v2089, %v1948
    %v2091 = vadd.f32 %v2090, %v1952
    %v2092 = vadd.f32 %v2091, %v1956
    %v2093 = vadd.f32 %v2092, %v1960
    %v2094 = vadd.f32 %v2093, %v1964
    %v2095 = vadd.f32 %v2094, %v1968
    %v2096 = vadd.f32 %v2095, %v1972
    %v2097 = vadd.f32 %v2096, %v1976
    %v2098 = vadd.f32 %v2097, %v1980
    %v2099 = vadd.f32 %v2098, %v1984
    %v2100 = vadd.f32 %v2099, %v1988
    %v2101 = vadd.f32 %v2100, %v1992
    %v2102 = vadd.f32 %v2101, %v1996
    %v2103 = vadd.f32 %v2102, %v2000
    %v2104 = vadd.f32 %v2103, %v2004
    %v2105 = vadd.f32 %v2104, %v2008
    %v2106 = vadd.f32 %v2105, %v2012
    %v2107 = vadd.f32 %v2106, %v2016
    %v2108 = vadd.f32 %v2107, %v2020
    %v2109 = vadd.f32 %v2108, %v2024
    %v2110 = vadd.f32 %v2109, %v2028
    %v2111 = vadd.f32 %v2110, %v2032
    %v2112 = vadd.f32 %v2111, %v2036
    %v2113 = vadd.f32 %v2112, %v2040
    %v2114 = vadd.f32 %v2113, %v2044
    %v2115 = vrot.slane %v2114, 4
    %v2116 = vadd.f32 %v2114, %v2115
    %v2117 = vrot.slane %v2116, 2
    %v2118 = vadd.f32 %v2116, %v2117
    %v2119 = vrot.slane %v2118, 1
    %v2120 = vadd.f32 %v2118, %v2119
    %v2121 = vadd.f32 %v1921, %v1925
    %v2122 = vadd.f32 %v2121, %v1929
    %v2123 = vadd.f32 %v2122, %v1933
    %v2124 = vadd.f32 %v2123, %v1937
    %v2125 = vadd.f32 %v2124, %v1941
    %v2126 = vadd.f32 %v2125, %v1945
    %v2127 = vadd.f32 %v2126, %v1949
    %v2128 = vadd.f32 %v2127, %v1953
    %v2129 = vadd.f32 %v2128, %v1957
    %v2130 = vadd.f32 %v2129, %v1961
    %v2131 = vadd.f32 %v2130, %v1965
    %v2132 = vadd.f32 %v2131, %v1969
    %v2133 = vadd.f32 %v2132, %v1973
    %v2134 = vadd.f32 %v2133, %v1977
    %v2135 = vadd.f32 %v2134, %v1981
    %v2136 = vadd.f32 %v2135, %v1985
    %v2137 = vadd.f32 %v2136, %v1989
    %v2138 = vadd.f32 %v2137, %v1993
    %v2139 = vadd.f32 %v2138, %v1997
    %v2140 = vadd.f32 %v2139, %v2001
    %v2141 = vadd.f32 %v2140, %v2005
    %v2142 = vadd.f32 %v2141, %v2009
    %v2143 = vadd.f32 %v2142, %v2013
    %v2144 = vadd.f32 %v2143, %v2017
    %v2145 = vadd.f32 %v2144, %v2021
    %v2146 = vadd.f32 %v2145, %v2025
    %v2147 = vadd.f32 %v2146, %v2029
    %v2148 = vadd.f32 %v2147, %v2033
    %v2149 = vadd.f32 %v2148, %v2037
    %v2150 = vadd.f32 %v2149, %v2041
    %v2151 = vadd.f32 %v2150, %v2045
    %v2152 = vrot.slane %v2151, 4
    %v2153 = vadd.f32 %v2151, %v2152
    %v2154 = vrot.slane %v2153, 2
    %v2155 = vadd.f32 %v2153, %v2154
    %v2156 = vrot.slane %v2155, 1
    %v2157 = vadd.f32 %v2155, %v2156
    %v2158 = vadd.f32 %v1922, %v1926
    %v2159 = vadd.f32 %v2158, %v1930
    %v2160 = vadd.f32 %v2159, %v1934
    %v2161 = vadd.f32 %v2160, %v1938
    %v2162 = vadd.f32 %v2161, %v1942
    %v2163 = vadd.f32 %v2162, %v1946
    %v2164 = vadd.f32 %v2163, %v1950
    %v2165 = vadd.f32 %v2164, %v1954
    %v2166 = vadd.f32 %v2165, %v1958
    %v2167 = vadd.f32 %v2166, %v1962
    %v2168 = vadd.f32 %v2167, %v1966
    %v2169 = vadd.f32 %v2168, %v1970
    %v2170 = vadd.f32 %v2169, %v1974
    %v2171 = vadd.f32 %v2170, %v1978
    %v2172 = vadd.f32 %v2171, %v1982
    %v2173 = vadd.f32 %v2172, %v1986
    %v2174 = vadd.f32 %v2173, %v1990
    %v2175 = vadd.f32 %v2174, %v1994
    %v2176 = vadd.f32 %v2175, %v1998
    %v2177 = vadd.f32 %v2176, %v2002
    %v2178 = vadd.f32 %v2177, %v2006
    %v2179 = vadd.f32 %v2178, %v2010
    %v2180 = vadd.f32 %v2179, %v2014
    %v2181 = vadd.f32 %v2180, %v2018
    %v2182 = vadd.f32 %v2181, %v2022
    %v2183 = vadd.f32 %v2182, %v2026
    %v2184 = vadd.f32 %v2183, %v2030
    %v2185 = vadd.f32 %v2184, %v2034
    %v2186 = vadd.f32 %v2185, %v2038
    %v2187 = vadd.f32 %v2186, %v2042
    %v2188 = vadd.f32 %v2187, %v2046
    %v2189 = vrot.slane %v2188, 4
    %v2190 = vadd.f32 %v2188, %v2189
    %v2191 = vrot.slane %v2190, 2
    %v2192 = vadd.f32 %v2190, %v2191
    %v2193 = vrot.slane %v2192, 1
    %v2194 = vadd.f32 %v2192, %v2193
    %v2195 = vsub.f32 %v1491, %v2083
    %v2196 = vsub.f32 %v1492, %v2120
    %v2197 = vsub.f32 %v1493, %v2157
    %v2198 = vsub.f32 %v1494, %v2194
    %v2199 = vmul.f32 %v2195, 1.442695
    %v2200 = vpow.pop %v2199
    %v2201 = vmul.f32 %v2196, 1.442695
    %v2202 = vpow.pop %v2201
    %v2203 = vmul.f32 %v2197, 1.442695
    %v2204 = vpow.pop %v2203
    %v2205 = vmul.f32 %v2198, 1.442695
    %v2206 = vpow.pop %v2205
    %v2207 = vsel %vm1503, %v2200, 0.0
    %v2208 = vsel %vm1504, %v2202, 0.0
    %v2209 = vsel %vm1505, %v2204, 0.0
    %v2210 = vsel %vm1506, %v2206, 0.0
    %v2211 = vsel %vm1507, %v2200, 0.0
    %v2212 = vsel %vm1508, %v2202, 0.0
    %v2213 = vsel %vm1509, %v2204, 0.0
    %v2214 = vsel %vm1510, %v2206, 0.0
    %v2215 = vsel %vm1511, %v2200, 0.0
    %v2216 = vsel %vm1512, %v2202, 0.0
    %v2217 = vsel %vm1513, %v2204, 0.0
    %v2218 = vsel %vm1514, %v2206, 0.0
    %v2219 = vsel %vm1515, %v2200, 0.0
    %v2220 = vsel %vm1516, %v2202, 0.0
    %v2221 = vsel %vm1517, %v2204, 0.0
    %v2222 = vsel %vm1518, %v2206, 0.0
    %v2223 = vsel %vm1519, %v2200, 0.0
    %v2224 = vsel %vm1520, %v2202, 0.0
    %v2225 = vsel %vm1521, %v2204, 0.0
    %v2226 = vsel %vm1522, %v2206, 0.0
    %v2227 = vsel %vm1523, %v2200, 0.0
    %v2228 = vsel %vm1524, %v2202, 0.0
    %v2229 = vsel %vm1525, %v2204, 0.0
    %v2230 = vsel %vm1526, %v2206, 0.0
    %v2231 = vsel %vm1527, %v2200, 0.0
    %v2232 = vsel %vm1528, %v2202, 0.0
    %v2233 = vsel %vm1529, %v2204, 0.0
    %v2234 = vsel %vm1530, %v2206, 0.0
    %v2235 = vsel %vm1531, %v2200, 0.0
    %v2236 = vsel %vm1532, %v2202, 0.0
    %v2237 = vsel %vm1533, %v2204, 0.0
    %v2238 = vsel %vm1534, %v2206, 0.0
    %v2239 = vsel %vm1535, %v2200, 0.0
    %v2240 = vsel %vm1536, %v2202, 0.0
    %v2241 = vsel %vm1537, %v2204, 0.0
    %v2242 = vsel %vm1538, %v2206, 0.0
    %v2243 = vsel %vm1539, %v2200, 0.0
    %v2244 = vsel %vm1540, %v2202, 0.0
    %v2245 = vsel %vm1541, %v2204, 0.0
    %v2246 = vsel %vm1542, %v2206, 0.0
    %v2247 = vsel %vm1543, %v2200, 0.0
    %v2248 = vsel %vm1544, %v2202, 0.0
    %v2249 = vsel %vm1545, %v2204, 0.0
    %v2250 = vsel %vm1546, %v2206, 0.0
    %v2251 = vsel %vm1547, %v2200, 0.0
    %v2252 = vsel %vm1548, %v2202, 0.0
    %v2253 = vsel %vm1549, %v2204, 0.0
    %v2254 = vsel %vm1550, %v2206, 0.0
    %v2255 = vsel %vm1551, %v2200, 0.0
    %v2256 = vsel %vm1552, %v2202, 0.0
    %v2257 = vsel %vm1553, %v2204, 0.0
    %v2258 = vsel %vm1554, %v2206, 0.0
    %v2259 = vsel %vm1555, %v2200, 0.0
    %v2260 = vsel %vm1556, %v2202, 0.0
    %v2261 = vsel %vm1557, %v2204, 0.0
    %v2262 = vsel %vm1558, %v2206, 0.0
    %v2263 = vsel %vm1559, %v2200, 0.0
    %v2264 = vsel %vm1560, %v2202, 0.0
    %v2265 = vsel %vm1561, %v2204, 0.0
    %v2266 = vsel %vm1562, %v2206, 0.0
    %v2267 = vsel %vm1563, %v2200, 0.0
    %v2268 = vsel %vm1564, %v2202, 0.0
    %v2269 = vsel %vm1565, %v2204, 0.0
    %v2270 = vsel %vm1566, %v2206, 0.0
    %v2271 = vsel %vm1567, %v2200, 0.0
    %v2272 = vsel %vm1568, %v2202, 0.0
    %v2273 = vsel %vm1569, %v2204, 0.0
    %v2274 = vsel %vm1570, %v2206, 0.0
    %v2275 = vsel %vm1571, %v2200, 0.0
    %v2276 = vsel %vm1572, %v2202, 0.0
    %v2277 = vsel %vm1573, %v2204, 0.0
    %v2278 = vsel %vm1574, %v2206, 0.0
    %v2279 = vsel %vm1575, %v2200, 0.0
    %v2280 = vsel %vm1576, %v2202, 0.0
    %v2281 = vsel %vm1577, %v2204, 0.0
    %v2282 = vsel %vm1578, %v2206, 0.0
    %v2283 = vsel %vm1579, %v2200, 0.0
    %v2284 = vsel %vm1580, %v2202, 0.0
    %v2285 = vsel %vm1581, %v2204, 0.0
    %v2286 = vsel %vm1582, %v2206, 0.0
    %v2287 = vsel %vm1583, %v2200, 0.0
    %v2288 = vsel %vm1584, %v2202, 0.0
    %v2289 = vsel %vm1585, %v2204, 0.0
    %v2290 = vsel %vm1586, %v2206, 0.0
    %v2291 = vsel %vm1587, %v2200, 0.0
    %v2292 = vsel %vm1588, %v2202, 0.0
    %v2293 = vsel %vm1589, %v2204, 0.0
    %v2294 = vsel %vm1590, %v2206, 0.0
    %v2295 = vsel %vm1591, %v2200, 0.0
    %v2296 = vsel %vm1592, %v2202, 0.0
    %v2297 = vsel %vm1593, %v2204, 0.0
    %v2298 = vsel %vm1594, %v2206, 0.0
    %v2299 = vsel %vm1595, %v2200, 0.0
    %v2300 = vsel %vm1596, %v2202, 0.0
    %v2301 = vsel %vm1597, %v2204, 0.0
    %v2302 = vsel %vm1598, %v2206, 0.0
    %v2303 = vsel %vm1599, %v2200, 0.0
    %v2304 = vsel %vm1600, %v2202, 0.0
    %v2305 = vsel %vm1601, %v2204, 0.0
    %v2306 = vsel %vm1602, %v2206, 0.0
    %v2307 = vsel %vm1603, %v2200, 0.0
    %v2308 = vsel %vm1604, %v2202, 0.0
    %v2309 = vsel %vm1605, %v2204, 0.0
    %v2310 = vsel %vm1606, %v2206, 0.0
    %v2311 = vsel %vm1607, %v2200, 0.0
    %v2312 = vsel %vm1608, %v2202, 0.0
    %v2313 = vsel %vm1609, %v2204, 0.0
    %v2314 = vsel %vm1610, %v2206, 0.0
    %v2315 = vsel %vm1611, %v2200, 0.0
    %v2316 = vsel %vm1612, %v2202, 0.0
    %v2317 = vsel %vm1613, %v2204, 0.0
    %v2318 = vsel %vm1614, %v2206, 0.0
    %v2319 = vsel %vm1615, %v2200, 0.0
    %v2320 = vsel %vm1616, %v2202, 0.0
    %v2321 = vsel %vm1617, %v2204, 0.0
    %v2322 = vsel %vm1618, %v2206, 0.0
    %v2323 = vsel %vm1619, %v2200, 0.0
    %v2324 = vsel %vm1620, %v2202, 0.0
    %v2325 = vsel %vm1621, %v2204, 0.0
    %v2326 = vsel %vm1622, %v2206, 0.0
    %v2327 = vsel %vm1623, %v2200, 0.0
    %v2328 = vsel %vm1624, %v2202, 0.0
    %v2329 = vsel %vm1625, %v2204, 0.0
    %v2330 = vsel %vm1626, %v2206, 0.0
    %v2331 = vsel %vm1627, %v2200, 0.0
    %v2332 = vsel %vm1628, %v2202, 0.0
    %v2333 = vsel %vm1629, %v2204, 0.0
    %v2334 = vsel %vm1630, %v2206, 0.0
    %v2335 = vadd.f32 %v2207, %v2208
    %v2336 = vadd.f32 %v2335, %v2209
    %v2337 = vadd.f32 %v2336, %v2210
    %2338 = vadd.xlane.f32.xlu0 %v2337
    %v2339 = vpop.xlane.xlu0 %2338
    %v2340 = vadd.f32 %v2211, %v2212
    %v2341 = vadd.f32 %v2340, %v2213
    %v2342 = vadd.f32 %v2341, %v2214
    %2343 = vadd.xlane.f32.xlu0 %v2342
    %v2344 = vpop.xlane.xlu0 %2343
    %v2345 = vadd.f32 %v2215, %v2216
    %v2346 = vadd.f32 %v2345, %v2217
    %v2347 = vadd.f32 %v2346, %v2218
    %2348 = vadd.xlane.f32.xlu0 %v2347
    %v2349 = vpop.xlane.xlu0 %2348
    %v2350 = vadd.f32 %v2219, %v2220
    %v2351 = vadd.f32 %v2350, %v2221
    %v2352 = vadd.f32 %v2351, %v2222
    %2353 = vadd.xlane.f32.xlu0 %v2352
    %v2354 = vpop.xlane.xlu0 %2353
    %v2355 = vadd.f32 %v2223, %v2224
    %v2356 = vadd.f32 %v2355, %v2225
    %v2357 = vadd.f32 %v2356, %v2226
    %2358 = vadd.xlane.f32.xlu0 %v2357
    %v2359 = vpop.xlane.xlu0 %2358
    %v2360 = vadd.f32 %v2227, %v2228
    %v2361 = vadd.f32 %v2360, %v2229
    %v2362 = vadd.f32 %v2361, %v2230
    %2363 = vadd.xlane.f32.xlu0 %v2362
    %v2364 = vpop.xlane.xlu0 %2363
    %v2365 = vadd.f32 %v2231, %v2232
    %v2366 = vadd.f32 %v2365, %v2233
    %v2367 = vadd.f32 %v2366, %v2234
    %2368 = vadd.xlane.f32.xlu0 %v2367
    %v2369 = vpop.xlane.xlu0 %2368
    %v2370 = vadd.f32 %v2235, %v2236
    %v2371 = vadd.f32 %v2370, %v2237
    %v2372 = vadd.f32 %v2371, %v2238
    %2373 = vadd.xlane.f32.xlu0 %v2372
    %v2374 = vpop.xlane.xlu0 %2373
    %v2375 = vadd.f32 %v2239, %v2240
    %v2376 = vadd.f32 %v2375, %v2241
    %v2377 = vadd.f32 %v2376, %v2242
    %2378 = vadd.xlane.f32.xlu0 %v2377
    %v2379 = vpop.xlane.xlu0 %2378
    %v2380 = vadd.f32 %v2243, %v2244
    %v2381 = vadd.f32 %v2380, %v2245
    %v2382 = vadd.f32 %v2381, %v2246
    %2383 = vadd.xlane.f32.xlu0 %v2382
    %v2384 = vpop.xlane.xlu0 %2383
    %v2385 = vadd.f32 %v2247, %v2248
    %v2386 = vadd.f32 %v2385, %v2249
    %v2387 = vadd.f32 %v2386, %v2250
    %2388 = vadd.xlane.f32.xlu0 %v2387
    %v2389 = vpop.xlane.xlu0 %2388
    %v2390 = vadd.f32 %v2251, %v2252
    %v2391 = vadd.f32 %v2390, %v2253
    %v2392 = vadd.f32 %v2391, %v2254
    %2393 = vadd.xlane.f32.xlu0 %v2392
    %v2394 = vpop.xlane.xlu0 %2393
    %v2395 = vadd.f32 %v2255, %v2256
    %v2396 = vadd.f32 %v2395, %v2257
    %v2397 = vadd.f32 %v2396, %v2258
    %2398 = vadd.xlane.f32.xlu0 %v2397
    %v2399 = vpop.xlane.xlu0 %2398
    %v2400 = vadd.f32 %v2259, %v2260
    %v2401 = vadd.f32 %v2400, %v2261
    %v2402 = vadd.f32 %v2401, %v2262
    %2403 = vadd.xlane.f32.xlu0 %v2402
    %v2404 = vpop.xlane.xlu0 %2403
    %v2405 = vadd.f32 %v2263, %v2264
    %v2406 = vadd.f32 %v2405, %v2265
    %v2407 = vadd.f32 %v2406, %v2266
    %2408 = vadd.xlane.f32.xlu0 %v2407
    %v2409 = vpop.xlane.xlu0 %2408
    %v2410 = vadd.f32 %v2267, %v2268
    %v2411 = vadd.f32 %v2410, %v2269
    %v2412 = vadd.f32 %v2411, %v2270
    %2413 = vadd.xlane.f32.xlu0 %v2412
    %v2414 = vpop.xlane.xlu0 %2413
    %v2415 = vadd.f32 %v2271, %v2272
    %v2416 = vadd.f32 %v2415, %v2273
    %v2417 = vadd.f32 %v2416, %v2274
    %2418 = vadd.xlane.f32.xlu0 %v2417
    %v2419 = vpop.xlane.xlu0 %2418
    %v2420 = vadd.f32 %v2275, %v2276
    %v2421 = vadd.f32 %v2420, %v2277
    %v2422 = vadd.f32 %v2421, %v2278
    %2423 = vadd.xlane.f32.xlu0 %v2422
    %v2424 = vpop.xlane.xlu0 %2423
    %v2425 = vadd.f32 %v2279, %v2280
    %v2426 = vadd.f32 %v2425, %v2281
    %v2427 = vadd.f32 %v2426, %v2282
    %2428 = vadd.xlane.f32.xlu0 %v2427
    %v2429 = vpop.xlane.xlu0 %2428
    %v2430 = vadd.f32 %v2283, %v2284
    %v2431 = vadd.f32 %v2430, %v2285
    %v2432 = vadd.f32 %v2431, %v2286
    %2433 = vadd.xlane.f32.xlu0 %v2432
    %v2434 = vpop.xlane.xlu0 %2433
    %v2435 = vadd.f32 %v2287, %v2288
    %v2436 = vadd.f32 %v2435, %v2289
    %v2437 = vadd.f32 %v2436, %v2290
    %2438 = vadd.xlane.f32.xlu0 %v2437
    %v2439 = vpop.xlane.xlu0 %2438
    %v2440 = vadd.f32 %v2291, %v2292
    %v2441 = vadd.f32 %v2440, %v2293
    %v2442 = vadd.f32 %v2441, %v2294
    %2443 = vadd.xlane.f32.xlu0 %v2442
    %v2444 = vpop.xlane.xlu0 %2443
    %v2445 = vadd.f32 %v2295, %v2296
    %v2446 = vadd.f32 %v2445, %v2297
    %v2447 = vadd.f32 %v2446, %v2298
    %2448 = vadd.xlane.f32.xlu0 %v2447
    %v2449 = vpop.xlane.xlu0 %2448
    %v2450 = vadd.f32 %v2299, %v2300
    %v2451 = vadd.f32 %v2450, %v2301
    %v2452 = vadd.f32 %v2451, %v2302
    %2453 = vadd.xlane.f32.xlu0 %v2452
    %v2454 = vpop.xlane.xlu0 %2453
    %v2455 = vadd.f32 %v2303, %v2304
    %v2456 = vadd.f32 %v2455, %v2305
    %v2457 = vadd.f32 %v2456, %v2306
    %2458 = vadd.xlane.f32.xlu0 %v2457
    %v2459 = vpop.xlane.xlu0 %2458
    %v2460 = vadd.f32 %v2307, %v2308
    %v2461 = vadd.f32 %v2460, %v2309
    %v2462 = vadd.f32 %v2461, %v2310
    %2463 = vadd.xlane.f32.xlu0 %v2462
    %v2464 = vpop.xlane.xlu0 %2463
    %v2465 = vadd.f32 %v2311, %v2312
    %v2466 = vadd.f32 %v2465, %v2313
    %v2467 = vadd.f32 %v2466, %v2314
    %2468 = vadd.xlane.f32.xlu0 %v2467
    %v2469 = vpop.xlane.xlu0 %2468
    %v2470 = vadd.f32 %v2315, %v2316
    %v2471 = vadd.f32 %v2470, %v2317
    %v2472 = vadd.f32 %v2471, %v2318
    %2473 = vadd.xlane.f32.xlu0 %v2472
    %v2474 = vpop.xlane.xlu0 %2473
    %v2475 = vadd.f32 %v2319, %v2320
    %v2476 = vadd.f32 %v2475, %v2321
    %v2477 = vadd.f32 %v2476, %v2322
    %2478 = vadd.xlane.f32.xlu0 %v2477
    %v2479 = vpop.xlane.xlu0 %2478
    %v2480 = vadd.f32 %v2323, %v2324
    %v2481 = vadd.f32 %v2480, %v2325
    %v2482 = vadd.f32 %v2481, %v2326
    %2483 = vadd.xlane.f32.xlu0 %v2482
    %v2484 = vpop.xlane.xlu0 %2483
    %v2485 = vadd.f32 %v2327, %v2328
    %v2486 = vadd.f32 %v2485, %v2329
    %v2487 = vadd.f32 %v2486, %v2330
    %2488 = vadd.xlane.f32.xlu0 %v2487
    %v2489 = vpop.xlane.xlu0 %2488
    %v2490 = vadd.f32 %v2331, %v2332
    %v2491 = vadd.f32 %v2490, %v2333
    %v2492 = vadd.f32 %v2491, %v2334
    %2493 = vadd.xlane.f32.xlu0 %v2492
    %v2494 = vpop.xlane.xlu0 %2493
    %v2495 = vsel %vm533, %v2339, 0.0
    %v2496 = vsel %vm534, %v2339, 0.0
    %v2497 = vsel %vm535, %v2339, 0.0
    %v2498 = vsel %vm536, %v2339, 0.0
    %v2499 = vsel %vm537, %v2344, 0.0
    %v2500 = vsel %vm538, %v2344, 0.0
    %v2501 = vsel %vm539, %v2344, 0.0
    %v2502 = vsel %vm540, %v2344, 0.0
    %v2503 = vsel %vm541, %v2349, 0.0
    %v2504 = vsel %vm542, %v2349, 0.0
    %v2505 = vsel %vm543, %v2349, 0.0
    %v2506 = vsel %vm544, %v2349, 0.0
    %v2507 = vsel %vm545, %v2354, 0.0
    %v2508 = vsel %vm546, %v2354, 0.0
    %v2509 = vsel %vm547, %v2354, 0.0
    %v2510 = vsel %vm548, %v2354, 0.0
    %v2511 = vsel %vm549, %v2359, 0.0
    %v2512 = vsel %vm550, %v2359, 0.0
    %v2513 = vsel %vm551, %v2359, 0.0
    %v2514 = vsel %vm552, %v2359, 0.0
    %v2515 = vsel %vm553, %v2364, 0.0
    %v2516 = vsel %vm554, %v2364, 0.0
    %v2517 = vsel %vm555, %v2364, 0.0
    %v2518 = vsel %vm556, %v2364, 0.0
    %v2519 = vsel %vm557, %v2369, 0.0
    %v2520 = vsel %vm558, %v2369, 0.0
    %v2521 = vsel %vm559, %v2369, 0.0
    %v2522 = vsel %vm560, %v2369, 0.0
    %v2523 = vsel %vm561, %v2374, 0.0
    %v2524 = vsel %vm562, %v2374, 0.0
    %v2525 = vsel %vm563, %v2374, 0.0
    %v2526 = vsel %vm564, %v2374, 0.0
    %v2527 = vsel %vm565, %v2379, 0.0
    %v2528 = vsel %vm566, %v2379, 0.0
    %v2529 = vsel %vm567, %v2379, 0.0
    %v2530 = vsel %vm568, %v2379, 0.0
    %v2531 = vsel %vm569, %v2384, 0.0
    %v2532 = vsel %vm570, %v2384, 0.0
    %v2533 = vsel %vm571, %v2384, 0.0
    %v2534 = vsel %vm572, %v2384, 0.0
    %v2535 = vsel %vm573, %v2389, 0.0
    %v2536 = vsel %vm574, %v2389, 0.0
    %v2537 = vsel %vm575, %v2389, 0.0
    %v2538 = vsel %vm576, %v2389, 0.0
    %v2539 = vsel %vm577, %v2394, 0.0
    %v2540 = vsel %vm578, %v2394, 0.0
    %v2541 = vsel %vm579, %v2394, 0.0
    %v2542 = vsel %vm580, %v2394, 0.0
    %v2543 = vsel %vm581, %v2399, 0.0
    %v2544 = vsel %vm582, %v2399, 0.0
    %v2545 = vsel %vm583, %v2399, 0.0
    %v2546 = vsel %vm584, %v2399, 0.0
    %v2547 = vsel %vm585, %v2404, 0.0
    %v2548 = vsel %vm586, %v2404, 0.0
    %v2549 = vsel %vm587, %v2404, 0.0
    %v2550 = vsel %vm588, %v2404, 0.0
    %v2551 = vsel %vm589, %v2409, 0.0
    %v2552 = vsel %vm590, %v2409, 0.0
    %v2553 = vsel %vm591, %v2409, 0.0
    %v2554 = vsel %vm592, %v2409, 0.0
    %v2555 = vsel %vm593, %v2414, 0.0
    %v2556 = vsel %vm594, %v2414, 0.0
    %v2557 = vsel %vm595, %v2414, 0.0
    %v2558 = vsel %vm596, %v2414, 0.0
    %v2559 = vsel %vm597, %v2419, 0.0
    %v2560 = vsel %vm598, %v2419, 0.0
    %v2561 = vsel %vm599, %v2419, 0.0
    %v2562 = vsel %vm600, %v2419, 0.0
    %v2563 = vsel %vm601, %v2424, 0.0
    %v2564 = vsel %vm602, %v2424, 0.0
    %v2565 = vsel %vm603, %v2424, 0.0
    %v2566 = vsel %vm604, %v2424, 0.0
    %v2567 = vsel %vm605, %v2429, 0.0
    %v2568 = vsel %vm606, %v2429, 0.0
    %v2569 = vsel %vm607, %v2429, 0.0
    %v2570 = vsel %vm608, %v2429, 0.0
    %v2571 = vsel %vm609, %v2434, 0.0
    %v2572 = vsel %vm610, %v2434, 0.0
    %v2573 = vsel %vm611, %v2434, 0.0
    %v2574 = vsel %vm612, %v2434, 0.0
    %v2575 = vsel %vm613, %v2439, 0.0
    %v2576 = vsel %vm614, %v2439, 0.0
    %v2577 = vsel %vm615, %v2439, 0.0
    %v2578 = vsel %vm616, %v2439, 0.0
    %v2579 = vsel %vm617, %v2444, 0.0
    %v2580 = vsel %vm618, %v2444, 0.0
    %v2581 = vsel %vm619, %v2444, 0.0
    %v2582 = vsel %vm620, %v2444, 0.0
    %v2583 = vsel %vm621, %v2449, 0.0
    %v2584 = vsel %vm622, %v2449, 0.0
    %v2585 = vsel %vm623, %v2449, 0.0
    %v2586 = vsel %vm624, %v2449, 0.0
    %v2587 = vsel %vm625, %v2454, 0.0
    %v2588 = vsel %vm626, %v2454, 0.0
    %v2589 = vsel %vm627, %v2454, 0.0
    %v2590 = vsel %vm628, %v2454, 0.0
    %v2591 = vsel %vm629, %v2459, 0.0
    %v2592 = vsel %vm630, %v2459, 0.0
    %v2593 = vsel %vm631, %v2459, 0.0
    %v2594 = vsel %vm632, %v2459, 0.0
    %v2595 = vsel %vm633, %v2464, 0.0
    %v2596 = vsel %vm634, %v2464, 0.0
    %v2597 = vsel %vm635, %v2464, 0.0
    %v2598 = vsel %vm636, %v2464, 0.0
    %v2599 = vsel %vm637, %v2469, 0.0
    %v2600 = vsel %vm638, %v2469, 0.0
    %v2601 = vsel %vm639, %v2469, 0.0
    %v2602 = vsel %vm640, %v2469, 0.0
    %v2603 = vsel %vm641, %v2474, 0.0
    %v2604 = vsel %vm642, %v2474, 0.0
    %v2605 = vsel %vm643, %v2474, 0.0
    %v2606 = vsel %vm644, %v2474, 0.0
    %v2607 = vsel %vm645, %v2479, 0.0
    %v2608 = vsel %vm646, %v2479, 0.0
    %v2609 = vsel %vm647, %v2479, 0.0
    %v2610 = vsel %vm648, %v2479, 0.0
    %v2611 = vsel %vm649, %v2484, 0.0
    %v2612 = vsel %vm650, %v2484, 0.0
    %v2613 = vsel %vm651, %v2484, 0.0
    %v2614 = vsel %vm652, %v2484, 0.0
    %v2615 = vsel %vm653, %v2489, 0.0
    %v2616 = vsel %vm654, %v2489, 0.0
    %v2617 = vsel %vm655, %v2489, 0.0
    %v2618 = vsel %vm656, %v2489, 0.0
    %v2619 = vsel %vm657, %v2494, 0.0
    %v2620 = vsel %vm658, %v2494, 0.0
    %v2621 = vsel %vm659, %v2494, 0.0
    %v2622 = vsel %vm660, %v2494, 0.0
    %v2623 = vadd.f32 %v2495, %v2499
    %v2624 = vadd.f32 %v2623, %v2503
    %v2625 = vadd.f32 %v2624, %v2507
    %v2626 = vadd.f32 %v2625, %v2511
    %v2627 = vadd.f32 %v2626, %v2515
    %v2628 = vadd.f32 %v2627, %v2519
    %v2629 = vadd.f32 %v2628, %v2523
    %v2630 = vadd.f32 %v2629, %v2527
    %v2631 = vadd.f32 %v2630, %v2531
    %v2632 = vadd.f32 %v2631, %v2535
    %v2633 = vadd.f32 %v2632, %v2539
    %v2634 = vadd.f32 %v2633, %v2543
    %v2635 = vadd.f32 %v2634, %v2547
    %v2636 = vadd.f32 %v2635, %v2551
    %v2637 = vadd.f32 %v2636, %v2555
    %v2638 = vadd.f32 %v2637, %v2559
    %v2639 = vadd.f32 %v2638, %v2563
    %v2640 = vadd.f32 %v2639, %v2567
    %v2641 = vadd.f32 %v2640, %v2571
    %v2642 = vadd.f32 %v2641, %v2575
    %v2643 = vadd.f32 %v2642, %v2579
    %v2644 = vadd.f32 %v2643, %v2583
    %v2645 = vadd.f32 %v2644, %v2587
    %v2646 = vadd.f32 %v2645, %v2591
    %v2647 = vadd.f32 %v2646, %v2595
    %v2648 = vadd.f32 %v2647, %v2599
    %v2649 = vadd.f32 %v2648, %v2603
    %v2650 = vadd.f32 %v2649, %v2607
    %v2651 = vadd.f32 %v2650, %v2611
    %v2652 = vadd.f32 %v2651, %v2615
    %v2653 = vadd.f32 %v2652, %v2619
    %v2654 = vrot.slane %v2653, 4
    %v2655 = vadd.f32 %v2653, %v2654
    %v2656 = vrot.slane %v2655, 2
    %v2657 = vadd.f32 %v2655, %v2656
    %v2658 = vrot.slane %v2657, 1
    %v2659 = vadd.f32 %v2657, %v2658
    %v2660 = vadd.f32 %v2496, %v2500
    %v2661 = vadd.f32 %v2660, %v2504
    %v2662 = vadd.f32 %v2661, %v2508
    %v2663 = vadd.f32 %v2662, %v2512
    %v2664 = vadd.f32 %v2663, %v2516
    %v2665 = vadd.f32 %v2664, %v2520
    %v2666 = vadd.f32 %v2665, %v2524
    %v2667 = vadd.f32 %v2666, %v2528
    %v2668 = vadd.f32 %v2667, %v2532
    %v2669 = vadd.f32 %v2668, %v2536
    %v2670 = vadd.f32 %v2669, %v2540
    %v2671 = vadd.f32 %v2670, %v2544
    %v2672 = vadd.f32 %v2671, %v2548
    %v2673 = vadd.f32 %v2672, %v2552
    %v2674 = vadd.f32 %v2673, %v2556
    %v2675 = vadd.f32 %v2674, %v2560
    %v2676 = vadd.f32 %v2675, %v2564
    %v2677 = vadd.f32 %v2676, %v2568
    %v2678 = vadd.f32 %v2677, %v2572
    %v2679 = vadd.f32 %v2678, %v2576
    %v2680 = vadd.f32 %v2679, %v2580
    %v2681 = vadd.f32 %v2680, %v2584
    %v2682 = vadd.f32 %v2681, %v2588
    %v2683 = vadd.f32 %v2682, %v2592
    %v2684 = vadd.f32 %v2683, %v2596
    %v2685 = vadd.f32 %v2684, %v2600
    %v2686 = vadd.f32 %v2685, %v2604
    %v2687 = vadd.f32 %v2686, %v2608
    %v2688 = vadd.f32 %v2687, %v2612
    %v2689 = vadd.f32 %v2688, %v2616
    %v2690 = vadd.f32 %v2689, %v2620
    %v2691 = vrot.slane %v2690, 4
    %v2692 = vadd.f32 %v2690, %v2691
    %v2693 = vrot.slane %v2692, 2
    %v2694 = vadd.f32 %v2692, %v2693
    %v2695 = vrot.slane %v2694, 1
    %v2696 = vadd.f32 %v2694, %v2695
    %v2697 = vadd.f32 %v2497, %v2501
    %v2698 = vadd.f32 %v2697, %v2505
    %v2699 = vadd.f32 %v2698, %v2509
    %v2700 = vadd.f32 %v2699, %v2513
    %v2701 = vadd.f32 %v2700, %v2517
    %v2702 = vadd.f32 %v2701, %v2521
    %v2703 = vadd.f32 %v2702, %v2525
    %v2704 = vadd.f32 %v2703, %v2529
    %v2705 = vadd.f32 %v2704, %v2533
    %v2706 = vadd.f32 %v2705, %v2537
    %v2707 = vadd.f32 %v2706, %v2541
    %v2708 = vadd.f32 %v2707, %v2545
    %v2709 = vadd.f32 %v2708, %v2549
    %v2710 = vadd.f32 %v2709, %v2553
    %v2711 = vadd.f32 %v2710, %v2557
    %v2712 = vadd.f32 %v2711, %v2561
    %v2713 = vadd.f32 %v2712, %v2565
    %v2714 = vadd.f32 %v2713, %v2569
    %v2715 = vadd.f32 %v2714, %v2573
    %v2716 = vadd.f32 %v2715, %v2577
    %v2717 = vadd.f32 %v2716, %v2581
    %v2718 = vadd.f32 %v2717, %v2585
    %v2719 = vadd.f32 %v2718, %v2589
    %v2720 = vadd.f32 %v2719, %v2593
    %v2721 = vadd.f32 %v2720, %v2597
    %v2722 = vadd.f32 %v2721, %v2601
    %v2723 = vadd.f32 %v2722, %v2605
    %v2724 = vadd.f32 %v2723, %v2609
    %v2725 = vadd.f32 %v2724, %v2613
    %v2726 = vadd.f32 %v2725, %v2617
    %v2727 = vadd.f32 %v2726, %v2621
    %v2728 = vrot.slane %v2727, 4
    %v2729 = vadd.f32 %v2727, %v2728
    %v2730 = vrot.slane %v2729, 2
    %v2731 = vadd.f32 %v2729, %v2730
    %v2732 = vrot.slane %v2731, 1
    %v2733 = vadd.f32 %v2731, %v2732
    %v2734 = vadd.f32 %v2498, %v2502
    %v2735 = vadd.f32 %v2734, %v2506
    %v2736 = vadd.f32 %v2735, %v2510
    %v2737 = vadd.f32 %v2736, %v2514
    %v2738 = vadd.f32 %v2737, %v2518
    %v2739 = vadd.f32 %v2738, %v2522
    %v2740 = vadd.f32 %v2739, %v2526
    %v2741 = vadd.f32 %v2740, %v2530
    %v2742 = vadd.f32 %v2741, %v2534
    %v2743 = vadd.f32 %v2742, %v2538
    %v2744 = vadd.f32 %v2743, %v2542
    %v2745 = vadd.f32 %v2744, %v2546
    %v2746 = vadd.f32 %v2745, %v2550
    %v2747 = vadd.f32 %v2746, %v2554
    %v2748 = vadd.f32 %v2747, %v2558
    %v2749 = vadd.f32 %v2748, %v2562
    %v2750 = vadd.f32 %v2749, %v2566
    %v2751 = vadd.f32 %v2750, %v2570
    %v2752 = vadd.f32 %v2751, %v2574
    %v2753 = vadd.f32 %v2752, %v2578
    %v2754 = vadd.f32 %v2753, %v2582
    %v2755 = vadd.f32 %v2754, %v2586
    %v2756 = vadd.f32 %v2755, %v2590
    %v2757 = vadd.f32 %v2756, %v2594
    %v2758 = vadd.f32 %v2757, %v2598
    %v2759 = vadd.f32 %v2758, %v2602
    %v2760 = vadd.f32 %v2759, %v2606
    %v2761 = vadd.f32 %v2760, %v2610
    %v2762 = vadd.f32 %v2761, %v2614
    %v2763 = vadd.f32 %v2762, %v2618
    %v2764 = vadd.f32 %v2763, %v2622
    %v2765 = vrot.slane %v2764, 4
    %v2766 = vadd.f32 %v2764, %v2765
    %v2767 = vrot.slane %v2766, 2
    %v2768 = vadd.f32 %v2766, %v2767
    %v2769 = vrot.slane %v2768, 1
    %v2770 = vadd.f32 %v2768, %v2769
    %v2771 = vadd.f32 %v2659, 1e-16
    %v2772 = vadd.f32 %v2696, 1e-16
    %v2773 = vadd.f32 %v2733, 1e-16
    %v2774 = vadd.f32 %v2770, 1e-16
    %v2775 = vrcp.pop %v2771
    %v2776 = vrcp.pop %v2772
    %v2777 = vrcp.pop %v2773
    %v2778 = vrcp.pop %v2774
    %v2779 = vmul.f32 %v2200, %v2775
    %v2780 = vmul.f32 %v2202, %v2776
    %v2781 = vmul.f32 %v2204, %v2777
    %v2782 = vmul.f32 %v2206, %v2778
    %v2783 = vadd.f32 %v2779, 0.5
    %v2784 = vadd.f32 %v2780, 0.5
    %v2785 = vadd.f32 %v2781, 0.5
    %v2786 = vadd.f32 %v2782, 0.5
    %v2791 = vcombine.low %v2783, %v2784
    %v2792 = vcombine.low %v2785, %v2786
    %v2794 = vunpack.c.l.s4 1966171168
    %v2795 = vunpack.c.0.s8 %v2794
    %v2796 = vlaneseq
    %v2797 = vshrl.u32 %v2796, 7
    %v2798 = vsub.s32 %v2795, %v2797
    %v2799 = vrot.slane %v2791, %v2798
    %v2801 = vunpack.c.l.s4 1966171168
    %v2802 = vunpack.c.0.s8 %v2801
    %v2803 = vlaneseq
    %v2804 = vshrl.u32 %v2803, 7
    %v2805 = vsub.s32 %v2802, %v2804
    %v2806 = vrot.slane %v2792, %v2805
    %v2807 = vcombine.low %v2799, %v2806
    %v2809 = vunpack.c.l.s4 1966171168
    %v2810 = vunpack.c.0.s8 %v2809
    %v2811 = vlaneseq
    %v2812 = vshrl.u32 %v2811, 7
    %v2813 = vsub.s32 %v2810, %v2812
    %v2814 = vrot.slane %v2807, %v2813
    %v2816 = vlaneseq
    %vm2817 = vcmp.ge.s32.totalorder %v2816, 0
    %vm2818 = vcmp.lt.s32.totalorder %v2816, 512
    %vm2819 = vmand %vm2817, %vm2818
    %2820 = vst.msk [vmem:[#allocation6] sm:$0xf] %vm2819, %v2814
    // Predicated region
    $region22: #{tpu_custom_call.1} parent=1 // pred_check
      _
    $region23: #{tpu_custom_call.1} parent=1 // pred_check_branch
      %2822 = sbr.rel (0) target = $region25
    $region24: #{tpu_custom_call.1} parent=1 // pred_region
      %s2824 = ssub.s32 64, 64
      %2825 = vsyncadd [#allocation5], %s2824
      %s2827 = sshll.u32 [#allocation6], 4
      %s2828 = int_to_ptr.vmem [resolvable:$true] %s2827
      %2830 = dma.vmem_to_hbm [thread:$0]  %s2828, 64, %s4, [#allocation5]
    $region25: #{tpu_custom_call.1} parent=1 // pred_fallthru
      _
    // Predicated region
    $region26: #{tpu_custom_call.1} parent=1 // pred_check
      _
    $region27: #{tpu_custom_call.1} parent=1 // pred_check_branch
      %2832 = sbr.rel (0) target = $region29
    $region28: #{tpu_custom_call.1} parent=1 // pred_region
      %2833 = dma.done [#allocation5], 64
    $region29: #{tpu_custom_call.1} parent=1 // pred_fallthru
      _
    %2834 = vsyncpa [#allocation4], 1
    %2835 = vsyncpa [#allocation5], 1

</llo_original>
